<compile_context>
chip_gen: v5e
topology: v5e:2x2
jax: 0.10.0
libtpu: 0.0.40
codegen_flags: <defaults>
</compile_context>

<pallas_src>
import jax
import jax.numpy as jnp
from jax.experimental import pallas as pl
from jax.experimental.pallas import tpu as pltpu

SELU_ALPHA = 1.6732632423543772848170429916717
SELU_SCALE = 1.0507009873554804934193349852946


def _selu(x):
    # Always evaluated in f32 (safe on v5e: no bf16 VPU/EUP).  exp(x)-1 keeps the plain
    # EUP exp lowering; cancellation for tiny negative x is negligible at f32.
    return SELU_SCALE * jnp.where(x > 0, x, SELU_ALPHA * (jnp.exp(x) - 1.0))


def _round_up(v, m):
    return -(-v // m) * m


def _make_kernel(depth, compute_dtype):
    def kernel(idx_ref, p_ref, q_ref, b0_ref, wd_ref, bd_ref, invd_ref,
               node_ref, edge_ref):
        i = pl.program_id(0)

        # Zero the resident node accumulator on the first edge tile.
        @pl.when(i == 0)
        def _init():
            node_ref[...] = jnp.zeros_like(node_ref)

        te = idx_ref.shape[0]
        n_pad = p_ref.shape[0]

        dst = idx_ref[:, 0:1]                    # (TE, 1) int32
        src = idx_ref[:, 1:2]                    # (TE, 1) int32

        # Per-tile gather one-hots built in-kernel (no dense (N, E) matrix from HBM).
        lane_iota = jax.lax.broadcasted_iota(jnp.int32, (te, n_pad), 1)
        g_dst = (lane_iota == dst).astype(compute_dtype)   # (TE, N_pad)
        g_src = (lane_iota == src).astype(compute_dtype)   # (TE, N_pad)

        # First (folded) layer: h0 = P[dst] + Q[src] + b0, gathered via MXU matmuls.
        h = (jnp.dot(g_dst, p_ref[...], preferred_element_type=jnp.float32)
             + jnp.dot(g_src, q_ref[...], preferred_element_type=jnp.float32)
             + b0_ref[...])
        h = _selu(h)

        # Remaining (folded) Linear+BN+SELU layers, static unroll over depth.
        for d in range(depth):
            h = jnp.dot(h.astype(compute_dtype), wd_ref[d],
                        preferred_element_type=jnp.float32) + bd_ref[d]
            h = _selu(h)

        edge_ref[...] = h.astype(edge_ref.dtype)  # per-edge activations (2nd output)

        # Unscaled scatter-accumulate into the resident node accumulator.  Reuse g_dst
        # (contract edge dims) -> no second one-hot, no explicit transpose.  Operands
        # are compute_dtype on the MXU; accumulation is f32 (1/deg applied at finalize).
        node_ref[...] += jax.lax.dot_general(
            g_dst, h.astype(compute_dtype),
            dimension_numbers=(((0,), (0,)), ((), ())),
            preferred_element_type=jnp.float32)

        # Finalize: mean = sum / deg (deg clamped to >= 1 in the wrapper).
        @pl.when(i == pl.num_programs(0) - 1)
        def _fin():
            node_ref[...] = node_ref[...] * invd_ref[...]

    return kernel


def _vmem_budget(n_pad, lp, te, depth_eff, cd_bytes, edge_bytes):
    """Shape-derived VMEM budget: residents (x2, conservative), streamed tiles (x2
    double buffers), and in-kernel one-hot intermediates not covered by BlockSpec."""
    residents = (2 * n_pad * lp * cd_bytes           # P, Q
                 + lp * 4                             # b0
                 + depth_eff * lp * lp * cd_bytes     # wd
                 + depth_eff * lp * 4                 # bd
                 + n_pad * 4                          # 1/deg
                 + n_pad * lp * 4)                    # node accumulator
    streamed = te * 2 * 4 + te * lp * edge_bytes
    intermediates = 3 * te * n_pad * cd_bytes + 4 * te * lp * 4
    need = 2 * residents + 2 * streamed + intermediates
    budget = int(need * 1.25) + (8 << 20)
    try:
        phys = pltpu.get_tpu_info().vmem_capacity_bytes
    except Exception:
        phys = 64 << 20                               # v7x physical (smallest gen)
    return max(16 << 20, min(budget, int(phys * 0.85)))


def edge_conv_block(x, edge_index, params, *, edge_tile=1024,
                    compute_dtype=jnp.bfloat16, edge_out_dtype=jnp.float32):
    """Pallas implementation of EdgeConvBlock.forward -> (node_out, edge_activations).

    edge_out_dtype=jnp.bfloat16 halves the streamed edge-output write traffic (useful
    on v5e's single vst slot / lowest HBM BW); default f32 keeps LRP-grade precision.
    """
    w0, b0, wd, bd = params
    n_nodes, feat = x.shape
    n_edges = edge_index.shape[1]
    layer = w0.shape[1]
    depth = int(wd.shape[0]) if (wd is not None and wd.ndim == 3) else 0

    # Padded / lane-dense sizes.
    lp = max(128, _round_up(layer, 128))        # feature dim, multiple of 128
    n_pad = max(128, _round_up(n_nodes, 128))   # node dim, multiple of 128 (lane / K dim)
    te = min(edge_tile, max(128, _round_up(n_edges, 128)))
    te = _round_up(te, 128)                     # edge tile, multiple of 128
    e_pad = _round_up(n_edges, te)
    n_tiles = e_pad // te

    cd_bytes = jnp.dtype(compute_dtype).itemsize
    edge_bytes = jnp.dtype(edge_out_dtype).itemsize

    xf = x.astype(jnp.float32)

    # Node-level projections replacing the per-edge concat + (E,2F)@(2F,L) first layer.
    p_nodes = xf @ w0[:feat].astype(jnp.float32)   # for x_i = x[dst]
    q_nodes = xf @ w0[feat:].astype(jnp.float32)   # for x_j = x[src]

    p_pad = jnp.zeros((n_pad, lp), jnp.float32).at[:n_nodes, :layer].set(p_nodes)
    q_pad = jnp.zeros((n_pad, lp), jnp.float32).at[:n_nodes, :layer].set(q_nodes)
    p_pad = p_pad.astype(compute_dtype)
    q_pad = q_pad.astype(compute_dtype)

    b0_pad = jnp.zeros((1, lp), jnp.float32).at[:, :layer].set(
        jnp.reshape(b0, (1, layer)).astype(jnp.float32))

    depth_eff = max(depth, 1)
    if depth > 0:
        wd_pad = jnp.zeros((depth, lp, lp), jnp.float32).at[:, :layer, :layer].set(
            wd.astype(jnp.float32)).astype(compute_dtype)
        bd_pad = jnp.zeros((depth, 1, lp), jnp.float32).at[:, :, :layer].set(
            jnp.reshape(bd, (depth, 1, layer)).astype(jnp.float32))
    else:  # dummies; static loop in the kernel skips them
        wd_pad = jnp.zeros((1, lp, lp), compute_dtype)
        bd_pad = jnp.zeros((1, 1, lp), jnp.float32)

    # Edge indices packed into one (E_pad, 2) int32 stream (col 0 = dst, col 1 = src).
    # Padded edges point at an out-of-range node id -> all-zero one-hots -> no effect.
    src = edge_index[0].astype(jnp.int32)
    dst = edge_index[1].astype(jnp.int32)
    pad_id = jnp.int32(n_pad)
    idx_pad = jnp.full((e_pad, 2), pad_id, jnp.int32)
    idx_pad = idx_pad.at[:n_edges, 0].set(dst).at[:n_edges, 1].set(src)

    # Degree (mean aggregation); clamp to 1 so isolated nodes output zeros.
    deg = jnp.zeros((n_pad,), jnp.float32).at[dst].add(1.0)
    inv_deg = (1.0 / jnp.maximum(deg, 1.0))[:, None]   # (N_pad, 1)

    kernel = _make_kernel(depth, compute_dtype)

    out_shapes = (jax.ShapeDtypeStruct((n_pad, lp), jnp.float32),    # node accumulator
                  jax.ShapeDtypeStruct((e_pad, lp), edge_out_dtype)) # edge activations

    in_specs = [
        pl.BlockSpec((te, 2), lambda i: (i, 0)),          # packed [dst, src] indices
        pl.BlockSpec((n_pad, lp), lambda i: (0, 0)),      # P (resident)
        pl.BlockSpec((n_pad, lp), lambda i: (0, 0)),      # Q (resident)
        pl.BlockSpec((1, lp), lambda i: (0, 0)),          # b0 (resident)
        pl.BlockSpec(wd_pad.shape, lambda i: (0, 0, 0)),  # wd (resident)
        pl.BlockSpec(bd_pad.shape, lambda i: (0, 0, 0)),  # bd (resident)
        pl.BlockSpec((n_pad, 1), lambda i: (0, 0)),       # 1/deg (resident)
    ]
    out_specs = (
        pl.BlockSpec((n_pad, lp), lambda i: (0, 0)),      # node accumulator (resident)
        pl.BlockSpec((te, lp), lambda i: (i, 0)),         # edge activations (streamed)
    )

    # Advisory cost so XLA schedules the wrapper-side projections around the call.
    flops = int(n_tiles * te * (3 * n_pad * lp + depth * lp * lp) * 2)
    transcendentals = int(e_pad * lp * (depth + 1))
    bytes_accessed = int(e_pad * 2 * 4 + e_pad * lp * edge_bytes
                         + 2 * n_pad * lp * cd_bytes + depth_eff * lp * lp * cd_bytes
                         + 2 * n_pad * lp * 4)
    cost = pl.CostEstimate(flops=flops, transcendentals=transcendentals,
                           bytes_accessed=bytes_accessed)

    node_pad, edge_pad = pl.pallas_call(
        kernel,
        out_shape=out_shapes,
        grid=(n_tiles,),
        in_specs=in_specs,
        out_specs=out_specs,
        cost_estimate=cost,
        compiler_params=pltpu.CompilerParams(
            # Node accumulator is carried across the edge-tile axis -> "arbitrary".
            dimension_semantics=("arbitrary",),
            vmem_limit_bytes=_vmem_budget(n_pad, lp, te, depth_eff,
                                          cd_bytes, edge_bytes),
        ),
    )(idx_pad, p_pad, q_pad, b0_pad, wd_pad, bd_pad, inv_deg)

    return node_pad[:n_nodes, :layer], edge_pad[:n_edges, :layer]


def init_params(key, in_size, layer_size, depth):
    """Deterministic Linear + BatchNorm1d(eval) parameters, BN folded into the Linear."""
    def fold(w, b, gamma, beta, mean, var, eps=1e-5):
        s = gamma / jnp.sqrt(var + eps)
        return w * s[None, :], b * s + (beta - mean * s)

    n_layers = depth + 1
    keys = jax.random.split(key, 4 * n_layers)
    ws, bs = [], []
    fan_in = in_size * 2
    for li in range(n_layers):
        k_w, k_b, k_g, k_be = keys[4 * li:4 * li + 4]
        w = 0.1 * jax.random.normal(k_w, (fan_in, layer_size), dtype=jnp.float32)
        b = 0.1 * jax.random.normal(k_b, (layer_size,), dtype=jnp.float32)
        gamma = 1.0 + 0.1 * jax.random.normal(k_g, (layer_size,), dtype=jnp.float32)
        beta = 0.1 * jax.random.normal(k_be, (layer_size,), dtype=jnp.float32)
        mean = jnp.zeros((layer_size,), jnp.float32)   # running stats at init
        var = jnp.ones((layer_size,), jnp.float32)
        wf, bf = fold(w, b, gamma, beta, mean, var)
        ws.append(wf)
        bs.append(bf)
        fan_in = layer_size
    w0, b0 = ws[0], bs[0].reshape(1, layer_size)
    if depth > 0:
        wd = jnp.stack(ws[1:], axis=0)                       # (depth, L, L)
        bd = jnp.stack(bs[1:], axis=0).reshape(depth, 1, layer_size)
    else:
        wd = jnp.zeros((0, layer_size, layer_size), jnp.float32)
        bd = jnp.zeros((0, 1, layer_size), jnp.float32)
    return w0, b0, wd, bd


def _reference(x, edge_index, params):
    """Pure-JAX f32 reference of the same inference-mode forward pass."""
    w0, b0, wd, bd = params
    src, dst = edge_index[0], edge_index[1]
    h = jnp.concatenate([x[dst], x[src]], axis=-1).astype(jnp.float32)
    h = _selu(h @ w0 + b0)
    for d in range(wd.shape[0]):
        h = _selu(h @ wd[d] + bd[d])
    n = x.shape[0]
    summed = jnp.zeros((n, h.shape[1]), jnp.float32).at[dst].add(h)
    deg = jnp.zeros((n,), jnp.float32).at[dst].add(1.0)
    node = summed / jnp.maximum(deg, 1.0)[:, None]
    return node, h


if __name__ == "__main__":
    in_size, layer_size, depth = 4, 32, 1
    num_nodes, num_edges = 20, 300          # E_pad=384 -> 3 edge tiles of 128

    key = jax.random.PRNGKey(0)
    k_x, k_e, k_p = jax.random.split(key, 3)

    x = jax.random.normal(k_x, (num_nodes, in_size), dtype=jnp.float32)
    edge_index = jax.random.randint(k_e, (2, num_edges), 0, num_nodes, dtype=jnp.int32)
    params = init_params(k_p, in_size, layer_size, depth)

    ref_node, ref_edge = _reference(x, edge_index, params)

    # f32 compute path: tight numerical match with the reference.
    node_f32, edge_f32 = edge_conv_block(
        x, edge_index, params, edge_tile=128, compute_dtype=jnp.float32)
    node_f32 = jax.block_until_ready(node_f32)
    edge_f32 = jax.block_until_ready(edge_f32)
    assert node_f32.shape == (num_nodes, layer_size)
    assert edge_f32.shape == (num_edges, layer_size)
    assert jnp.allclose(node_f32, ref_node, atol=1e-4, rtol=1e-4)
    assert jnp.allclose(edge_f32, ref_edge, atol=1e-4, rtol=1e-4)

    # Default bf16-MXU path (f32 accumulation / SELU / aggregation): looser tolerance.
    node_bf, edge_bf = edge_conv_block(x, edge_index, params, edge_tile=128)
    node_bf = jax.block_until_ready(node_bf)
    edge_bf = jax.block_until_ready(edge_bf)
    assert jnp.allclose(node_bf, ref_node, atol=3e-2, rtol=3e-2)
    assert jnp.allclose(edge_bf, ref_edge, atol=3e-2, rtol=3e-2)

    print("KERNEL_OK")
</pallas_src>

<mosaic_0001>
module attributes {stable_mosaic.version = 11 : i64} {
  func.func @kernel(%arg0: i32, %arg1: memref<128x2xi32, #tpu.memory_space<vmem>>, %arg2: memref<128x128xf32, #tpu.memory_space<vmem>>, %arg3: memref<128x128xf32, #tpu.memory_space<vmem>>, %arg4: memref<1x128xf32, #tpu.memory_space<vmem>>, %arg5: memref<1x128x128xf32, #tpu.memory_space<vmem>>, %arg6: memref<1x1x128xf32, #tpu.memory_space<vmem>>, %arg7: memref<128x1xf32, #tpu.memory_space<vmem>>, %arg8: memref<128x128xf32, #tpu.memory_space<vmem>>, %arg9: memref<128x128xf32, #tpu.memory_space<vmem>>) attributes {dimension_semantics = [#tpu.dimension_semantics<arbitrary>], iteration_bounds = array<i64: 3>, scalar_prefetch = 0 : i64, scratch_operands = 0 : i64, tpu.core_type = #tpu.core_type<tc>, window_params = [{transform_indices = @transform_0, window_bounds = array<i64: 128, 2>}, {pipeline_mode = #tpu.pipeline_mode<synchronous>, transform_indices = @transform_1, window_bounds = array<i64: 128, 128>}, {pipeline_mode = #tpu.pipeline_mode<synchronous>, transform_indices = @transform_2, window_bounds = array<i64: 128, 128>}, {pipeline_mode = #tpu.pipeline_mode<synchronous>, transform_indices = @transform_3, window_bounds = array<i64: 1, 128>}, {pipeline_mode = #tpu.pipeline_mode<synchronous>, transform_indices = @transform_4, window_bounds = array<i64: 1, 128, 128>}, {pipeline_mode = #tpu.pipeline_mode<synchronous>, transform_indices = @transform_5, window_bounds = array<i64: 1, 1, 128>}, {pipeline_mode = #tpu.pipeline_mode<synchronous>, transform_indices = @transform_6, window_bounds = array<i64: 128, 1>}, {pipeline_mode = #tpu.pipeline_mode<synchronous>, transform_indices = @transform_7, window_bounds = array<i64: 128, 128>}, {transform_indices = @transform_8, window_bounds = array<i64: 128, 128>}]} {
    %c0_i32 = arith.constant 0 : i32
    %0 = arith.cmpi eq, %arg0, %c0_i32 : i32
    %1 = arith.extui %0 : i1 to i32
    %c0_i32_0 = arith.constant 0 : i32
    %2 = arith.cmpi ne, %1, %c0_i32_0 : i32
    scf.if %2 {
      %cst_33 = arith.constant 0.000000e+00 : f32
      %57 = vector.broadcast %cst_33 : f32 to vector<128x128xf32>
      %c0_34 = arith.constant 0 : index
      %c0_35 = arith.constant 0 : index
      %58 = vector.load %arg8[%c0_34, %c0_35] : memref<128x128xf32, #tpu.memory_space<vmem>>, vector<128x128xf32>
      tpu.vector_store %arg8[%c0_34, %c0_35], %57 {strides = array<i32>} : memref<128x128xf32, #tpu.memory_space<vmem>>, vector<128x128xf32>,
    } else {
    }
    %c0 = arith.constant 0 : index
    %c0_1 = arith.constant 0 : index
    %3 = vector.load %arg1[%c0, %c0_1] : memref<128x2xi32, #tpu.memory_space<vmem>>, vector<128x1xi32>
    %c0_2 = arith.constant 0 : index
    %c1 = arith.constant 1 : index
    %4 = vector.load %arg1[%c0_2, %c1] : memref<128x2xi32, #tpu.memory_space<vmem>>, vector<128x1xi32>
    %5 = tpu.iota {dimensions = array<i32: 1>} : vector<128x128xi32>
    %6 = vector.broadcast %3 : vector<128x1xi32> to vector<128x128xi32>
    %7 = arith.cmpi eq, %5, %6 : vector<128x128xi32>
    %8 = arith.extui %7 : vector<128x128xi1> to vector<128x128xi32>
    %9 = arith.sitofp %8 : vector<128x128xi32> to vector<128x128xf32>
    %10 = vector.broadcast %4 : vector<128x1xi32> to vector<128x128xi32>
    %11 = arith.cmpi eq, %5, %10 : vector<128x128xi32>
    %12 = arith.extui %11 : vector<128x128xi1> to vector<128x128xi32>
    %13 = arith.sitofp %12 : vector<128x128xi32> to vector<128x128xf32>
    %c0_3 = arith.constant 0 : index
    %c0_4 = arith.constant 0 : index
    %14 = vector.load %arg2[%c0_3, %c0_4] : memref<128x128xf32, #tpu.memory_space<vmem>>, vector<128x128xf32>
    %cst = arith.constant dense<0.000000e+00> : vector<128x128xf32>
    %15 = tpu.matmul %9, %14, %cst {dimension_numbers = #tpu.dot_dimension_numbers<[1], [0], [0], [1], [0, 0, 1, 1], [], []>} : vector<128x128xf32>, vector<128x128xf32>, vector<128x128xf32> -> vector<128x128xf32>
    %c0_5 = arith.constant 0 : index
    %c0_6 = arith.constant 0 : index
    %16 = vector.load %arg3[%c0_5, %c0_6] : memref<128x128xf32, #tpu.memory_space<vmem>>, vector<128x128xf32>
    %cst_7 = arith.constant dense<0.000000e+00> : vector<128x128xf32>
    %17 = tpu.matmul %13, %16, %cst_7 {dimension_numbers = #tpu.dot_dimension_numbers<[1], [0], [0], [1], [0, 0, 1, 1], [], []>} : vector<128x128xf32>, vector<128x128xf32>, vector<128x128xf32> -> vector<128x128xf32>
    %18 = arith.addf %15, %17 : vector<128x128xf32>
    %c0_8 = arith.constant 0 : index
    %c0_9 = arith.constant 0 : index
    %19 = vector.load %arg4[%c0_8, %c0_9] : memref<1x128xf32, #tpu.memory_space<vmem>>, vector<1x128xf32>
    %20 = vector.broadcast %19 : vector<1x128xf32> to vector<128x128xf32>
    %21 = arith.addf %18, %20 : vector<128x128xf32>
    %cst_10 = arith.constant 0.000000e+00 : f32
    %22 = vector.broadcast %cst_10 : f32 to vector<128x128xf32>
    %23 = arith.cmpf ogt, %21, %22 : vector<128x128xf32>
    %24 = math.exp %21 : vector<128x128xf32>
    %cst_11 = arith.constant 1.000000e+00 : f32
    %25 = vector.broadcast %cst_11 : f32 to vector<128x128xf32>
    %26 = arith.subf %24, %25 : vector<128x128xf32>
    %cst_12 = arith.constant 1.67326319 : f32
    %27 = vector.broadcast %cst_12 : f32 to vector<128x128xf32>
    %28 = arith.mulf %27, %26 : vector<128x128xf32>
    %29 = arith.select %23, %21, %28 : vector<128x128xi1>, vector<128x128xf32>
    %cst_13 = arith.constant 1.05070102 : f32
    %30 = vector.broadcast %cst_13 : f32 to vector<128x128xf32>
    %31 = arith.mulf %30, %29 : vector<128x128xf32>
    %c0_14 = arith.constant 0 : index
    %c0_15 = arith.constant 0 : index
    %c0_16 = arith.constant 0 : index
    %32 = vector.load %arg5[%c0_14, %c0_15, %c0_16] : memref<1x128x128xf32, #tpu.memory_space<vmem>>, vector<1x128x128xf32>
    %33 = vector.shape_cast %32 : vector<1x128x128xf32> to vector<128x128xf32>
    %cst_17 = arith.constant dense<0.000000e+00> : vector<128x128xf32>
    %34 = tpu.matmul %31, %33, %cst_17 {dimension_numbers = #tpu.dot_dimension_numbers<[1], [0], [0], [1], [0, 0, 1, 1], [], []>} : vector<128x128xf32>, vector<128x128xf32>, vector<128x128xf32> -> vector<128x128xf32>
    %c0_18 = arith.constant 0 : index
    %c0_19 = arith.constant 0 : index
    %c0_20 = arith.constant 0 : index
    %35 = vector.load %arg6[%c0_18, %c0_19, %c0_20] : memref<1x1x128xf32, #tpu.memory_space<vmem>>, vector<1x1x128xf32>
    %36 = vector.shape_cast %35 : vector<1x1x128xf32> to vector<1x128xf32>
    %37 = vector.broadcast %36 : vector<1x128xf32> to vector<128x128xf32>
    %38 = arith.addf %34, %37 : vector<128x128xf32>
    %cst_21 = arith.constant 0.000000e+00 : f32
    %39 = vector.broadcast %cst_21 : f32 to vector<128x128xf32>
    %40 = arith.cmpf ogt, %38, %39 : vector<128x128xf32>
    %41 = math.exp %38 : vector<128x128xf32>
    %cst_22 = arith.constant 1.000000e+00 : f32
    %42 = vector.broadcast %cst_22 : f32 to vector<128x128xf32>
    %43 = arith.subf %41, %42 : vector<128x128xf32>
    %cst_23 = arith.constant 1.67326319 : f32
    %44 = vector.broadcast %cst_23 : f32 to vector<128x128xf32>
    %45 = arith.mulf %44, %43 : vector<128x128xf32>
    %46 = arith.select %40, %38, %45 : vector<128x128xi1>, vector<128x128xf32>
    %cst_24 = arith.constant 1.05070102 : f32
    %47 = vector.broadcast %cst_24 : f32 to vector<128x128xf32>
    %48 = arith.mulf %47, %46 : vector<128x128xf32>
    %c0_25 = arith.constant 0 : index
    %c0_26 = arith.constant 0 : index
    %49 = vector.load %arg9[%c0_25, %c0_26] : memref<128x128xf32, #tpu.memory_space<vmem>>, vector<128x128xf32>
    tpu.vector_store %arg9[%c0_25, %c0_26], %48 {strides = array<i32>} : memref<128x128xf32, #tpu.memory_space<vmem>>, vector<128x128xf32>,
    %c0_27 = arith.constant 0 : index
    %c0_28 = arith.constant 0 : index
    %50 = vector.load %arg8[%c0_27, %c0_28] : memref<128x128xf32, #tpu.memory_space<vmem>>, vector<128x128xf32>
    %cst_29 = arith.constant dense<0.000000e+00> : vector<128x128xf32>
    %51 = tpu.matmul %9, %48, %cst_29 {dimension_numbers = #tpu.dot_dimension_numbers<[0], [0], [1], [1], [0, 1, 1, 1], [], []>} : vector<128x128xf32>, vector<128x128xf32>, vector<128x128xf32> -> vector<128x128xf32>
    %52 = arith.addf %50, %51 : vector<128x128xf32>
    %c0_30 = arith.constant 0 : index
    %c0_31 = arith.constant 0 : index
    %53 = vector.load %arg8[%c0_30, %c0_31] : memref<128x128xf32, #tpu.memory_space<vmem>>, vector<128x128xf32>
    tpu.vector_store %arg8[%c0_30, %c0_31], %52 {strides = array<i32>} : memref<128x128xf32, #tpu.memory_space<vmem>>, vector<128x128xf32>,
    %c2_i32 = arith.constant 2 : i32
    %54 = arith.cmpi eq, %arg0, %c2_i32 : i32
    %55 = arith.extui %54 : i1 to i32
    %c0_i32_32 = arith.constant 0 : i32
    %56 = arith.cmpi ne, %55, %c0_i32_32 : i32
    scf.if %56 {
      %c0_33 = arith.constant 0 : index
      %c0_34 = arith.constant 0 : index
      %57 = vector.load %arg8[%c0_33, %c0_34] : memref<128x128xf32, #tpu.memory_space<vmem>>, vector<128x128xf32>
      %c0_35 = arith.constant 0 : index
      %c0_36 = arith.constant 0 : index
      %58 = vector.load %arg7[%c0_35, %c0_36] : memref<128x1xf32, #tpu.memory_space<vmem>>, vector<128x1xf32>
      %59 = vector.broadcast %58 : vector<128x1xf32> to vector<128x128xf32>
      %60 = arith.mulf %57, %59 : vector<128x128xf32>
      %c0_37 = arith.constant 0 : index
      %c0_38 = arith.constant 0 : index
      %61 = vector.load %arg8[%c0_37, %c0_38] : memref<128x128xf32, #tpu.memory_space<vmem>>, vector<128x128xf32>
      tpu.vector_store %arg8[%c0_37, %c0_38], %60 {strides = array<i32>} : memref<128x128xf32, #tpu.memory_space<vmem>>, vector<128x128xf32>,
    } else {
    }
    return
  }
  func.func @transform_0(%arg0: i32) -> (i32, i32) {
    %c0_i32 = arith.constant 0 : i32
    %c0_i32_0 = arith.constant 0 : i32
    return %arg0, %c0_i32 : i32, i32
  }
  func.func @transform_1(%arg0: i32) -> (i32, i32) {
    %c0_i32 = arith.constant 0 : i32
    %c0_i32_0 = arith.constant 0 : i32
    %c0_i32_1 = arith.constant 0 : i32
    return %c0_i32, %c0_i32_0 : i32, i32
  }
  func.func @transform_2(%arg0: i32) -> (i32, i32) {
    %c0_i32 = arith.constant 0 : i32
    %c0_i32_0 = arith.constant 0 : i32
    %c0_i32_1 = arith.constant 0 : i32
    return %c0_i32, %c0_i32_0 : i32, i32
  }
  func.func @transform_3(%arg0: i32) -> (i32, i32) {
    %c0_i32 = arith.constant 0 : i32
    %c0_i32_0 = arith.constant 0 : i32
    %c0_i32_1 = arith.constant 0 : i32
    return %c0_i32, %c0_i32_0 : i32, i32
  }
  func.func @transform_4(%arg0: i32) -> (i32, i32, i32) {
    %c0_i32 = arith.constant 0 : i32
    %c0_i32_0 = arith.constant 0 : i32
    %c0_i32_1 = arith.constant 0 : i32
    %c0_i32_2 = arith.constant 0 : i32
    return %c0_i32, %c0_i32_0, %c0_i32_1 : i32, i32, i32
  }
  func.func @transform_5(%arg0: i32) -> (i32, i32, i32) {
    %c0_i32 = arith.constant 0 : i32
    %c0_i32_0 = arith.constant 0 : i32
    %c0_i32_1 = arith.constant 0 : i32
    %c0_i32_2 = arith.constant 0 : i32
    return %c0_i32, %c0_i32_0, %c0_i32_1 : i32, i32, i32
  }
  func.func @transform_6(%arg0: i32) -> (i32, i32) {
    %c0_i32 = arith.constant 0 : i32
    %c0_i32_0 = arith.constant 0 : i32
    %c0_i32_1 = arith.constant 0 : i32
    return %c0_i32, %c0_i32_0 : i32, i32
  }
  func.func @transform_7(%arg0: i32) -> (i32, i32) {
    %c0_i32 = arith.constant 0 : i32
    %c0_i32_0 = arith.constant 0 : i32
    %c0_i32_1 = arith.constant 0 : i32
    return %c0_i32, %c0_i32_0 : i32, i32
  }
  func.func @transform_8(%arg0: i32) -> (i32, i32) {
    %c0_i32 = arith.constant 0 : i32
    %c0_i32_0 = arith.constant 0 : i32
    return %arg0, %c0_i32 : i32, i32
  }
}

</mosaic_0001>

<llo_original>
// kernel: tpu_custom_call.1
$region0: #{tpu_custom_call.1}
  #allocation0 [shape = 'u32[]', space=smem, size = 0x4, offset = 0x4, fixed_abs, tag = 'smem constant byte address 0x4 - core index']
  #allocation1 [shape = 'u32[72,128]{1,0:T(1,128)}', space=vmem, size = 0x9000, scoped, tag = 'internal scratch']
  %s0 = inlined_call_operand.vmem [shape: s32[384,2], index: 0, kind: input, shape index: {}]
  %s1 = inlined_call_operand.vmem [shape: f32[128,128], index: 1, kind: input, shape index: {}]
  %s2 = inlined_call_operand.vmem [shape: f32[128,128], index: 2, kind: input, shape index: {}]
  %s3 = inlined_call_operand.vmem [shape: f32[1,128], index: 3, kind: input, shape index: {}]
  %s4 = inlined_call_operand.vmem [shape: f32[1,128,128], index: 4, kind: input, shape index: {}]
  %s5 = inlined_call_operand.vmem [shape: f32[1,1,128], index: 5, kind: input, shape index: {}]
  %s6 = inlined_call_operand.vmem [shape: f32[128,1], index: 6, kind: input, shape index: {}]
  %s7 = inlined_call_operand.hbm [shape: f32[128,128], index: 7, kind: output, shape index: {0}]
  %s8 = inlined_call_operand.hbm [shape: f32[384,128], index: 8, kind: output, shape index: {1}]
  %9 = xla_tuple %s7, %s8
  %s10 = sld [smem:[#allocation0]]
  $region77: #{tpu_custom_call.1} parent=0
    _
  %s12 = ssub.s32 1, %s10
  %s13 = scalar_select 0, %s12, %s10
  $region1: #{tpu_custom_call.1} parent=0
    #allocation2 [shape = 'u8[65536]{0}', space=vmem, size = 0x10000, scoped, tag = 'output window, operand 0, single buffered']
    #allocation3 [shape = 's32[2]{0}', space=sflag, size = 0x8, scoped, tag = 'scoped memory for tpu_custom_call.1']
    #allocation4 [shape = 'u8[131072]{0}', space=vmem, size = 0x20000, scoped, tag = 'output window, operand 1']
    #allocation5 [shape = 's32[2]{0}', space=sflag, size = 0x8, scoped, tag = 'scoped memory for tpu_custom_call.1']
    %14 = vsyncpa [#allocation3], 0
    %15 = vsyncpa [#allocation5], 0
    %s16 = scalar_lea.sflag [#allocation5], 1
    %17 = vsyncpa %s16, 0
    loop: start=0, step=1, limit=5
    $region2: #{tpu_custom_call.1} parent=1 // loop_pre_header
      _
    $region3: #{tpu_custom_call.1} parent=1 // loop_header
      %s19 = sphi 0, %s23
      %p20 = scmp.ge.s32.totalorder %s19, 5
      %s29 = sphi 0, %s31
      %s32 = sphi 0, %s29
      %s33 = sphi 0, %s32
      %s49 = sphi 0, %s33
      %s53 = sphi 0, %s53
      %s55 = sphi 0, %s53
      %s56 = sphi 0, %s55
      %s70 = sphi 0, %s56
      %s74 = sphi 0, %s74
      %s76 = sphi 0, %s74
      %s77 = sphi 0, %s76
      %s91 = sphi 0, %s77
      %s95 = sphi 0, %s95
      %s97 = sphi 0, %s95
      %s98 = sphi 0, %s97
      %s112 = sphi 0, %s98
      %s116 = sphi 0, %s116
      %s118 = sphi 0, %s116
      %s119 = sphi 0, %s118
      %s133 = sphi 0, %s119
      %s137 = sphi 0, %s137
      %s139 = sphi 0, %s137
      %s140 = sphi 0, %s139
      %s154 = sphi 0, %s140
      %s158 = sphi 0, %s158
      %s160 = sphi 0, %s158
      %s161 = sphi 0, %s160
      %s175 = sphi 0, %s161
      %s179 = sphi 0, %s179
      %s181 = sphi 0, %s179
      %s182 = sphi 0, %s181
      %s196 = sphi 0, %s182
      %s202 = sphi 0, %s204
      %s205 = sphi 0, %s202
      %s206 = sphi 0, %s205
      %s222 = sphi 0, %s206
    $region4: #{tpu_custom_call.1} parent=1 // loop_header_branch
      %22 = sbr.rel (%p20) target = $region8
    $region5: #{tpu_custom_call.1} parent=1 // loop_body
      %s24 = ssub.s32 %s19, 1
      %s25 = ssub.s32 %s19, 2
      %s26 = sadd.s32 %s19, 1
      %s27 = ssub.s32 %s19, %s26
      %p28 = scmp.eq.s32.totalorder %s27, 0
      %s30 = sadd.s32 %s29, 1
      %s31 = scalar_select %p28, %s29, %s30
      %p34 = pneg %p28
      %p35 = scmp.eq.s32.totalorder %s19, 2
      %p36 = por %p34, %p35
      %p37 = scmp.ne.s32.totalorder %s29, %s32
      %p38 = scmp.eq.s32.totalorder %s19, 0
      %p39 = por %p37, %p38
      %p40 = scmp.ne.s32.totalorder %s29, %s32
      %p41 = scmp.eq.s32.totalorder %s24, 2
      %p42 = por %p40, %p41
      %p43 = scmp.ne.s32.totalorder %s32, %s33
      %p44 = scmp.eq.s32.totalorder %s24, 0
      %p45 = por %p43, %p44
      %p46 = scmp.ne.s32.totalorder %s32, %s33
      %p47 = scmp.eq.s32.totalorder %s25, 2
      %p48 = por %p46, %p47
      %p50 = scmp.ne.s32.totalorder %s33, %s49
      %p51 = scmp.eq.s32.totalorder %s25, 0
      %p52 = por %p50, %p51
      %s54 = sadd.s32 %s53, 1
      %p57 = scmp.eq.s32.totalorder %s19, 2
      %p58 = scmp.ne.s32.totalorder %s53, %s55
      %p59 = scmp.eq.s32.totalorder %s19, 0
      %p60 = por %p58, %p59
      %p61 = scmp.ne.s32.totalorder %s53, %s55
      %p62 = scmp.eq.s32.totalorder %s24, 2
      %p63 = por %p61, %p62
      %p64 = scmp.ne.s32.totalorder %s55, %s56
      %p65 = scmp.eq.s32.totalorder %s24, 0
      %p66 = por %p64, %p65
      %p67 = scmp.ne.s32.totalorder %s55, %s56
      %p68 = scmp.eq.s32.totalorder %s25, 2
      %p69 = por %p67, %p68
      %p71 = scmp.ne.s32.totalorder %s56, %s70
      %p72 = scmp.eq.s32.totalorder %s25, 0
      %p73 = por %p71, %p72
      %s75 = sadd.s32 %s74, 1
      %p78 = scmp.eq.s32.totalorder %s19, 2
      %p79 = scmp.ne.s32.totalorder %s74, %s76
      %p80 = scmp.eq.s32.totalorder %s19, 0
      %p81 = por %p79, %p80
      %p82 = scmp.ne.s32.totalorder %s74, %s76
      %p83 = scmp.eq.s32.totalorder %s24, 2
      %p84 = por %p82, %p83
      %p85 = scmp.ne.s32.totalorder %s76, %s77
      %p86 = scmp.eq.s32.totalorder %s24, 0
      %p87 = por %p85, %p86
      %p88 = scmp.ne.s32.totalorder %s76, %s77
      %p89 = scmp.eq.s32.totalorder %s25, 2
      %p90 = por %p88, %p89
      %p92 = scmp.ne.s32.totalorder %s77, %s91
      %p93 = scmp.eq.s32.totalorder %s25, 0
      %p94 = por %p92, %p93
      %s96 = sadd.s32 %s95, 1
      %p99 = scmp.eq.s32.totalorder %s19, 2
      %p100 = scmp.ne.s32.totalorder %s95, %s97
      %p101 = scmp.eq.s32.totalorder %s19, 0
      %p102 = por %p100, %p101
      %p103 = scmp.ne.s32.totalorder %s95, %s97
      %p104 = scmp.eq.s32.totalorder %s24, 2
      %p105 = por %p103, %p104
      %p106 = scmp.ne.s32.totalorder %s97, %s98
      %p107 = scmp.eq.s32.totalorder %s24, 0
      %p108 = por %p106, %p107
      %p109 = scmp.ne.s32.totalorder %s97, %s98
      %p110 = scmp.eq.s32.totalorder %s25, 2
      %p111 = por %p109, %p110
      %p113 = scmp.ne.s32.totalorder %s98, %s112
      %p114 = scmp.eq.s32.totalorder %s25, 0
      %p115 = por %p113, %p114
      %s117 = sadd.s32 %s116, 1
      %p120 = scmp.eq.s32.totalorder %s19, 2
      %p121 = scmp.ne.s32.totalorder %s116, %s118
      %p122 = scmp.eq.s32.totalorder %s19, 0
      %p123 = por %p121, %p122
      %p124 = scmp.ne.s32.totalorder %s116, %s118
      %p125 = scmp.eq.s32.totalorder %s24, 2
      %p126 = por %p124, %p125
      %p127 = scmp.ne.s32.totalorder %s118, %s119
      %p128 = scmp.eq.s32.totalorder %s24, 0
      %p129 = por %p127, %p128
      %p130 = scmp.ne.s32.totalorder %s118, %s119
      %p131 = scmp.eq.s32.totalorder %s25, 2
      %p132 = por %p130, %p131
      %p134 = scmp.ne.s32.totalorder %s119, %s133
      %p135 = scmp.eq.s32.totalorder %s25, 0
      %p136 = por %p134, %p135
      %s138 = sadd.s32 %s137, 1
      %p141 = scmp.eq.s32.totalorder %s19, 2
      %p142 = scmp.ne.s32.totalorder %s137, %s139
      %p143 = scmp.eq.s32.totalorder %s19, 0
      %p144 = por %p142, %p143
      %p145 = scmp.ne.s32.totalorder %s137, %s139
      %p146 = scmp.eq.s32.totalorder %s24, 2
      %p147 = por %p145, %p146
      %p148 = scmp.ne.s32.totalorder %s139, %s140
      %p149 = scmp.eq.s32.totalorder %s24, 0
      %p150 = por %p148, %p149
      %p151 = scmp.ne.s32.totalorder %s139, %s140
      %p152 = scmp.eq.s32.totalorder %s25, 2
      %p153 = por %p151, %p152
      %p155 = scmp.ne.s32.totalorder %s140, %s154
      %p156 = scmp.eq.s32.totalorder %s25, 0
      %p157 = por %p155, %p156
      %s159 = sadd.s32 %s158, 1
      %p162 = scmp.eq.s32.totalorder %s19, 2
      %p163 = scmp.ne.s32.totalorder %s158, %s160
      %p164 = scmp.eq.s32.totalorder %s19, 0
      %p165 = por %p163, %p164
      %p166 = scmp.ne.s32.totalorder %s158, %s160
      %p167 = scmp.eq.s32.totalorder %s24, 2
      %p168 = por %p166, %p167
      %p169 = scmp.ne.s32.totalorder %s160, %s161
      %p170 = scmp.eq.s32.totalorder %s24, 0
      %p171 = por %p169, %p170
      %p172 = scmp.ne.s32.totalorder %s160, %s161
      %p173 = scmp.eq.s32.totalorder %s25, 2
      %p174 = por %p172, %p173
      %p176 = scmp.ne.s32.totalorder %s161, %s175
      %p177 = scmp.eq.s32.totalorder %s25, 0
      %p178 = por %p176, %p177
      %s180 = sadd.s32 %s179, 1
      %p183 = scmp.eq.s32.totalorder %s19, 2
      %p184 = scmp.ne.s32.totalorder %s179, %s181
      %p185 = scmp.eq.s32.totalorder %s19, 0
      %p186 = por %p184, %p185
      %p187 = scmp.ne.s32.totalorder %s179, %s181
      %p188 = scmp.eq.s32.totalorder %s24, 2
      %p189 = por %p187, %p188
      %p190 = scmp.ne.s32.totalorder %s181, %s182
      %p191 = scmp.eq.s32.totalorder %s24, 0
      %p192 = por %p190, %p191
      %p193 = scmp.ne.s32.totalorder %s181, %s182
      %p194 = scmp.eq.s32.totalorder %s25, 2
      %p195 = por %p193, %p194
      %p197 = scmp.ne.s32.totalorder %s182, %s196
      %p198 = scmp.eq.s32.totalorder %s25, 0
      %p199 = por %p197, %p198
      %s200 = ssub.s32 %s19, %s26
      %p201 = scmp.eq.s32.totalorder %s200, 0
      %s203 = sadd.s32 %s202, 1
      %s204 = scalar_select %p201, %s202, %s203
      %p207 = pneg %p201
      %p208 = scmp.eq.s32.totalorder %s19, 2
      %p209 = por %p207, %p208
      %p210 = scmp.ne.s32.totalorder %s202, %s205
      %p211 = scmp.eq.s32.totalorder %s19, 0
      %p212 = por %p210, %p211
      %p213 = scmp.ne.s32.totalorder %s202, %s205
      %p214 = scmp.eq.s32.totalorder %s24, 2
      %p215 = por %p213, %p214
      %p216 = scmp.ne.s32.totalorder %s205, %s206
      %p217 = scmp.eq.s32.totalorder %s24, 0
      %p218 = por %p216, %p217
      %p219 = scmp.ne.s32.totalorder %s205, %s206
      %p220 = scmp.eq.s32.totalorder %s25, 2
      %p221 = por %p219, %p220
      %p223 = scmp.ne.s32.totalorder %s206, %s222
      %p224 = scmp.eq.s32.totalorder %s25, 0
      %p225 = por %p223, %p224
      %p226 = scmp.le.s32.totalorder 1, %s19
      %p227 = scmp.lt.s32.totalorder %s19, 4
      %p228 = pnand %p226, %p227
      %p229 = pneg %p228
      // Predicated region
      $region9: #{tpu_custom_call.1} parent=5 // pred_check
        _
      $region10: #{tpu_custom_call.1} parent=5 // pred_check_branch
        %231 = sbr.rel (%p228) target = $region12
      $region11: #{tpu_custom_call.1} parent=5 // pred_region
        %s232 = ssub.s32 %s19, 1
        // Predicated region
        $region13: #{tpu_custom_call.1} parent=11 // pred_check
          %p233 = pneg %p66
        $region14: #{tpu_custom_call.1} parent=11 // pred_check_branch
          %235 = sbr.rel (%p233) target = $region16
        $region15: #{tpu_custom_call.1} parent=11 // pred_region
          _
        $region16: #{tpu_custom_call.1} parent=11 // pred_fallthru
          _
        // Predicated region
        $region17: #{tpu_custom_call.1} parent=11 // pred_check
          %p236 = pneg %p87
        $region18: #{tpu_custom_call.1} parent=11 // pred_check_branch
          %238 = sbr.rel (%p236) target = $region20
        $region19: #{tpu_custom_call.1} parent=11 // pred_region
          _
        $region20: #{tpu_custom_call.1} parent=11 // pred_fallthru
          _
        // Predicated region
        $region21: #{tpu_custom_call.1} parent=11 // pred_check
          %p239 = pneg %p108
        $region22: #{tpu_custom_call.1} parent=11 // pred_check_branch
          %241 = sbr.rel (%p239) target = $region24
        $region23: #{tpu_custom_call.1} parent=11 // pred_region
          _
        $region24: #{tpu_custom_call.1} parent=11 // pred_fallthru
          _
        // Predicated region
        $region25: #{tpu_custom_call.1} parent=11 // pred_check
          %p242 = pneg %p129
        $region26: #{tpu_custom_call.1} parent=11 // pred_check_branch
          %244 = sbr.rel (%p242) target = $region28
        $region27: #{tpu_custom_call.1} parent=11 // pred_region
          _
        $region28: #{tpu_custom_call.1} parent=11 // pred_fallthru
          _
        // Predicated region
        $region29: #{tpu_custom_call.1} parent=11 // pred_check
          %p245 = pneg %p150
        $region30: #{tpu_custom_call.1} parent=11 // pred_check_branch
          %247 = sbr.rel (%p245) target = $region32
        $region31: #{tpu_custom_call.1} parent=11 // pred_region
          _
        $region32: #{tpu_custom_call.1} parent=11 // pred_fallthru
          _
        // Predicated region
        $region33: #{tpu_custom_call.1} parent=11 // pred_check
          %p248 = pneg %p171
        $region34: #{tpu_custom_call.1} parent=11 // pred_check_branch
          %250 = sbr.rel (%p248) target = $region36
        $region35: #{tpu_custom_call.1} parent=11 // pred_region
          _
        $region36: #{tpu_custom_call.1} parent=11 // pred_fallthru
          _
      $region12: #{tpu_custom_call.1} parent=5 // pred_fallthru
        _
      %p251 = scmp.lt.s32.totalorder %s19, 3
      // Predicated region
      $region37: #{tpu_custom_call.1} parent=5 // pred_check
        %p252 = pneg %p251
      $region38: #{tpu_custom_call.1} parent=5 // pred_check_branch
        %254 = sbr.rel (%p252) target = $region40
      $region39: #{tpu_custom_call.1} parent=5 // pred_region
        // Predicated region
        $region41: #{tpu_custom_call.1} parent=39 // pred_check
          %p255 = pneg %p39
        $region42: #{tpu_custom_call.1} parent=39 // pred_check_branch
          %257 = sbr.rel (%p255) target = $region44
        $region43: #{tpu_custom_call.1} parent=39 // pred_region
          %s258 = smul.u32 16, %s19
          %p259 = scmp.lt.s32.totalorder %s258, 47
          %s260 = scalar_select %p259, %s258, 47
          %s261 = smul.addr %s260, 8
          %s262 = scalar_lea.vmem %s0, %s261
          %s263 = smul.u32 16, %s19
        $region44: #{tpu_custom_call.1} parent=39 // pred_fallthru
          _
      $region40: #{tpu_custom_call.1} parent=5 // pred_fallthru
        _
      %p264 = scmp.le.s32.totalorder 1, %s19
      %p265 = scmp.lt.s32.totalorder %s19, 4
      %p266 = pnand %p264, %p265
      %p267 = pneg %p266
      // Predicated region
      $region45: #{tpu_custom_call.1} parent=5 // pred_check
        _
      $region46: #{tpu_custom_call.1} parent=5 // pred_check_branch
        %269 = sbr.rel (%p266) target = $region48
      $region47: #{tpu_custom_call.1} parent=5 // pred_region
        %s270 = ssub.s32 %s19, 1
        %s271 = smul.u32 16, %s24
        %p272 = scmp.lt.s32.totalorder %s271, 47
        %s273 = scalar_select %p272, %s271, 47
        %s274 = smul.addr %s273, 8
        %s275 = scalar_lea.vmem %s0, %s274
        %p276 = pneg %p45
        %p277 = pneg %p42
        %p278 = pneg %p66
        %p279 = pneg %p63
        %p280 = pneg %p87
        %p281 = pneg %p84
        %p282 = pneg %p108
        %p283 = pneg %p105
        %p284 = pneg %p129
        %p285 = pneg %p126
        %p286 = pneg %p150
        %p287 = pneg %p147
        %p288 = pneg %p171
        %p289 = pneg %p168
        %p290 = pneg %p192
        %p291 = pneg %p189
        %p292 = pneg %p218
        %p293 = pneg %p215
        %s294 = sand.u32 %s205, 1
        %s295 = scalar_lea.sflag [#allocation5], %s294
        %s296 = sand.u32 %s205, 1
        %s297 = smul.addr %s296, 128
        %s298 = scalar_lea.vmem [#allocation4], %s297
        %s299 = smul.u32 16, %s24
        %p300 = scmp.lt.s32.totalorder %s299, 47
        %s301 = scalar_select %p300, %s299, 47
        %s302 = smul.addr %s301, 8
        %s303 = scalar_lea.vmem %s0, %s302
        %s304 = smul.u32 16, %s24
        %s305 = smul.u32 16, %s24
        %p306 = scmp.eq.s32.totalorder %s24, 0
        // Predicated region
        $region49: #{tpu_custom_call.1} parent=47 // pred_check
          %p307 = pneg %p306
        $region50: #{tpu_custom_call.1} parent=47 // pred_check_branch
          %309 = sbr.rel (%p307) target = $region52
        $region51: #{tpu_custom_call.1} parent=47 // pred_region
          %310 = vst [vmem:[#allocation2] sm:$0xff] 0.0
          %311 = vst [vmem:[#allocation2 + $0x8] sm:$0xff] 0.0
          %312 = vst [vmem:[#allocation2 + $0x10] sm:$0xff] 0.0
          %313 = vst [vmem:[#allocation2 + $0x18] sm:$0xff] 0.0
          %314 = vst [vmem:[#allocation2 + $0x20] sm:$0xff] 0.0
          %315 = vst [vmem:[#allocation2 + $0x28] sm:$0xff] 0.0
          %316 = vst [vmem:[#allocation2 + $0x30] sm:$0xff] 0.0
          %317 = vst [vmem:[#allocation2 + $0x38] sm:$0xff] 0.0
          %318 = vst [vmem:[#allocation2 + $0x40] sm:$0xff] 0.0
          %319 = vst [vmem:[#allocation2 + $0x48] sm:$0xff] 0.0
          %320 = vst [vmem:[#allocation2 + $0x50] sm:$0xff] 0.0
          %321 = vst [vmem:[#allocation2 + $0x58] sm:$0xff] 0.0
          %322 = vst [vmem:[#allocation2 + $0x60] sm:$0xff] 0.0
          %323 = vst [vmem:[#allocation2 + $0x68] sm:$0xff] 0.0
          %324 = vst [vmem:[#allocation2 + $0x70] sm:$0xff] 0.0
          %325 = vst [vmem:[#allocation2 + $0x78] sm:$0xff] 0.0
        $region52: #{tpu_custom_call.1} parent=47 // pred_fallthru
          _
        %v326 = vld [vmem:[%s303] sm:$0xff]
        %v327 = vld [vmem:[%s303 + $0x8] sm:$0xff]
        %v328 = vld [vmem:[%s303 + $0x10] sm:$0xff]
        %v329 = vld [vmem:[%s303 + $0x18] sm:$0xff]
        %v330 = vld [vmem:[%s303 + $0x20] sm:$0xff]
        %v331 = vld [vmem:[%s303 + $0x28] sm:$0xff]
        %v332 = vld [vmem:[%s303 + $0x30] sm:$0xff]
        %v333 = vld [vmem:[%s303 + $0x38] sm:$0xff]
        %v334 = vld [vmem:[%s303 + $0x40] sm:$0xff]
        %v335 = vld [vmem:[%s303 + $0x48] sm:$0xff]
        %v336 = vld [vmem:[%s303 + $0x50] sm:$0xff]
        %v337 = vld [vmem:[%s303 + $0x58] sm:$0xff]
        %v338 = vld [vmem:[%s303 + $0x60] sm:$0xff]
        %v339 = vld [vmem:[%s303 + $0x68] sm:$0xff]
        %v340 = vld [vmem:[%s303 + $0x70] sm:$0xff]
        %v341 = vld [vmem:[%s303 + $0x78] sm:$0xff]
        %v342 = vlaneseq
        %v343 = vand.u32 %v342, 127
        %344 = vset.pattern.permute.xlu0 0
        %345 = vperm.xlu0 %344, %v326
        %v346 = vpop.permute.xlu0 %345
        %347 = vset.pattern.permute.xlu0 0
        %348 = vperm.xlu0 %347, %v327
        %v349 = vpop.permute.xlu0 %348
        %350 = vset.pattern.permute.xlu0 0
        %351 = vperm.xlu0 %350, %v328
        %v352 = vpop.permute.xlu0 %351
        %353 = vset.pattern.permute.xlu0 0
        %354 = vperm.xlu0 %353, %v329
        %v355 = vpop.permute.xlu0 %354
        %356 = vset.pattern.permute.xlu0 0
        %357 = vperm.xlu0 %356, %v330
        %v358 = vpop.permute.xlu0 %357
        %359 = vset.pattern.permute.xlu0 0
        %360 = vperm.xlu0 %359, %v331
        %v361 = vpop.permute.xlu0 %360
        %362 = vset.pattern.permute.xlu0 0
        %363 = vperm.xlu0 %362, %v332
        %v364 = vpop.permute.xlu0 %363
        %365 = vset.pattern.permute.xlu0 0
        %366 = vperm.xlu0 %365, %v333
        %v367 = vpop.permute.xlu0 %366
        %368 = vset.pattern.permute.xlu0 0
        %369 = vperm.xlu0 %368, %v334
        %v370 = vpop.permute.xlu0 %369
        %371 = vset.pattern.permute.xlu0 0
        %372 = vperm.xlu0 %371, %v335
        %v373 = vpop.permute.xlu0 %372
        %374 = vset.pattern.permute.xlu0 0
        %375 = vperm.xlu0 %374, %v336
        %v376 = vpop.permute.xlu0 %375
        %377 = vset.pattern.permute.xlu0 0
        %378 = vperm.xlu0 %377, %v337
        %v379 = vpop.permute.xlu0 %378
        %380 = vset.pattern.permute.xlu0 0
        %381 = vperm.xlu0 %380, %v338
        %v382 = vpop.permute.xlu0 %381
        %383 = vset.pattern.permute.xlu0 0
        %384 = vperm.xlu0 %383, %v339
        %v385 = vpop.permute.xlu0 %384
        %386 = vset.pattern.permute.xlu0 0
        %387 = vperm.xlu0 %386, %v340
        %v388 = vpop.permute.xlu0 %387
        %389 = vset.pattern.permute.xlu0 0
        %390 = vperm.xlu0 %389, %v341
        %v391 = vpop.permute.xlu0 %390
        %vm392 = vcmp.eq.s32.totalorder %v343, %v346
        %vm393 = vcmp.eq.s32.totalorder %v343, %v349
        %vm394 = vcmp.eq.s32.totalorder %v343, %v352
        %vm395 = vcmp.eq.s32.totalorder %v343, %v355
        %vm396 = vcmp.eq.s32.totalorder %v343, %v358
        %vm397 = vcmp.eq.s32.totalorder %v343, %v361
        %vm398 = vcmp.eq.s32.totalorder %v343, %v364
        %vm399 = vcmp.eq.s32.totalorder %v343, %v367
        %vm400 = vcmp.eq.s32.totalorder %v343, %v370
        %vm401 = vcmp.eq.s32.totalorder %v343, %v373
        %vm402 = vcmp.eq.s32.totalorder %v343, %v376
        %vm403 = vcmp.eq.s32.totalorder %v343, %v379
        %vm404 = vcmp.eq.s32.totalorder %v343, %v382
        %vm405 = vcmp.eq.s32.totalorder %v343, %v385
        %vm406 = vcmp.eq.s32.totalorder %v343, %v388
        %vm407 = vcmp.eq.s32.totalorder %v343, %v391
        %v408 = vsel %vm392, 1, 0
        %v409 = vsel %vm393, 1, 0
        %v410 = vsel %vm394, 1, 0
        %v411 = vsel %vm395, 1, 0
        %v412 = vsel %vm396, 1, 0
        %v413 = vsel %vm397, 1, 0
        %v414 = vsel %vm398, 1, 0
        %v415 = vsel %vm399, 1, 0
        %v416 = vsel %vm400, 1, 0
        %v417 = vsel %vm401, 1, 0
        %v418 = vsel %vm402, 1, 0
        %v419 = vsel %vm403, 1, 0
        %v420 = vsel %vm404, 1, 0
        %v421 = vsel %vm405, 1, 0
        %v422 = vsel %vm406, 1, 0
        %v423 = vsel %vm407, 1, 0
        %v424 = vcvt.s32.f32 %v408
        %v425 = vcvt.s32.f32 %v409
        %v426 = vcvt.s32.f32 %v410
        %v427 = vcvt.s32.f32 %v411
        %v428 = vcvt.s32.f32 %v412
        %v429 = vcvt.s32.f32 %v413
        %v430 = vcvt.s32.f32 %v414
        %v431 = vcvt.s32.f32 %v415
        %v432 = vcvt.s32.f32 %v416
        %v433 = vcvt.s32.f32 %v417
        %v434 = vcvt.s32.f32 %v418
        %v435 = vcvt.s32.f32 %v419
        %v436 = vcvt.s32.f32 %v420
        %v437 = vcvt.s32.f32 %v421
        %v438 = vcvt.s32.f32 %v422
        %v439 = vcvt.s32.f32 %v423
        %440 = vset.pattern.permute.xlu0 1
        %441 = vperm.xlu0 %440, %v326
        %v442 = vpop.permute.xlu0 %441
        %443 = vset.pattern.permute.xlu0 1
        %444 = vperm.xlu0 %443, %v327
        %v445 = vpop.permute.xlu0 %444
        %446 = vset.pattern.permute.xlu0 1
        %447 = vperm.xlu0 %446, %v328
        %v448 = vpop.permute.xlu0 %447
        %449 = vset.pattern.permute.xlu0 1
        %450 = vperm.xlu0 %449, %v329
        %v451 = vpop.permute.xlu0 %450
        %452 = vset.pattern.permute.xlu0 1
        %453 = vperm.xlu0 %452, %v330
        %v454 = vpop.permute.xlu0 %453
        %455 = vset.pattern.permute.xlu0 1
        %456 = vperm.xlu0 %455, %v331
        %v457 = vpop.permute.xlu0 %456
        %458 = vset.pattern.permute.xlu0 1
        %459 = vperm.xlu0 %458, %v332
        %v460 = vpop.permute.xlu0 %459
        %461 = vset.pattern.permute.xlu0 1
        %462 = vperm.xlu0 %461, %v333
        %v463 = vpop.permute.xlu0 %462
        %464 = vset.pattern.permute.xlu0 1
        %465 = vperm.xlu0 %464, %v334
        %v466 = vpop.permute.xlu0 %465
        %467 = vset.pattern.permute.xlu0 1
        %468 = vperm.xlu0 %467, %v335
        %v469 = vpop.permute.xlu0 %468
        %470 = vset.pattern.permute.xlu0 1
        %471 = vperm.xlu0 %470, %v336
        %v472 = vpop.permute.xlu0 %471
        %473 = vset.pattern.permute.xlu0 1
        %474 = vperm.xlu0 %473, %v337
        %v475 = vpop.permute.xlu0 %474
        %476 = vset.pattern.permute.xlu0 1
        %477 = vperm.xlu0 %476, %v338
        %v478 = vpop.permute.xlu0 %477
        %479 = vset.pattern.permute.xlu0 1
        %480 = vperm.xlu0 %479, %v339
        %v481 = vpop.permute.xlu0 %480
        %482 = vset.pattern.permute.xlu0 1
        %483 = vperm.xlu0 %482, %v340
        %v484 = vpop.permute.xlu0 %483
        %485 = vset.pattern.permute.xlu0 1
        %486 = vperm.xlu0 %485, %v341
        %v487 = vpop.permute.xlu0 %486
        %vm488 = vcmp.eq.s32.totalorder %v343, %v442
        %vm489 = vcmp.eq.s32.totalorder %v343, %v445
        %vm490 = vcmp.eq.s32.totalorder %v343, %v448
        %vm491 = vcmp.eq.s32.totalorder %v343, %v451
        %vm492 = vcmp.eq.s32.totalorder %v343, %v454
        %vm493 = vcmp.eq.s32.totalorder %v343, %v457
        %vm494 = vcmp.eq.s32.totalorder %v343, %v460
        %vm495 = vcmp.eq.s32.totalorder %v343, %v463
        %vm496 = vcmp.eq.s32.totalorder %v343, %v466
        %vm497 = vcmp.eq.s32.totalorder %v343, %v469
        %vm498 = vcmp.eq.s32.totalorder %v343, %v472
        %vm499 = vcmp.eq.s32.totalorder %v343, %v475
        %vm500 = vcmp.eq.s32.totalorder %v343, %v478
        %vm501 = vcmp.eq.s32.totalorder %v343, %v481
        %vm502 = vcmp.eq.s32.totalorder %v343, %v484
        %vm503 = vcmp.eq.s32.totalorder %v343, %v487
        %v504 = vsel %vm488, 1, 0
        %v505 = vsel %vm489, 1, 0
        %v506 = vsel %vm490, 1, 0
        %v507 = vsel %vm491, 1, 0
        %v508 = vsel %vm492, 1, 0
        %v509 = vsel %vm493, 1, 0
        %v510 = vsel %vm494, 1, 0
        %v511 = vsel %vm495, 1, 0
        %v512 = vsel %vm496, 1, 0
        %v513 = vsel %vm497, 1, 0
        %v514 = vsel %vm498, 1, 0
        %v515 = vsel %vm499, 1, 0
        %v516 = vsel %vm500, 1, 0
        %v517 = vsel %vm501, 1, 0
        %v518 = vsel %vm502, 1, 0
        %v519 = vsel %vm503, 1, 0
        %v520 = vcvt.s32.f32 %v504
        %v521 = vcvt.s32.f32 %v505
        %v522 = vcvt.s32.f32 %v506
        %v523 = vcvt.s32.f32 %v507
        %v524 = vcvt.s32.f32 %v508
        %v525 = vcvt.s32.f32 %v509
        %v526 = vcvt.s32.f32 %v510
        %v527 = vcvt.s32.f32 %v511
        %v528 = vcvt.s32.f32 %v512
        %v529 = vcvt.s32.f32 %v513
        %v530 = vcvt.s32.f32 %v514
        %v531 = vcvt.s32.f32 %v515
        %v532 = vcvt.s32.f32 %v516
        %v533 = vcvt.s32.f32 %v517
        %v534 = vcvt.s32.f32 %v518
        %v535 = vcvt.s32.f32 %v519
        %v536 = vld [vmem:[%s1] sm:$0xff]
        %v537 = vld [vmem:[%s1 + $0x8] sm:$0xff]
        %v538 = vld [vmem:[%s1 + $0x10] sm:$0xff]
        %v539 = vld [vmem:[%s1 + $0x18] sm:$0xff]
        %v540 = vld [vmem:[%s1 + $0x20] sm:$0xff]
        %v541 = vld [vmem:[%s1 + $0x28] sm:$0xff]
        %v542 = vld [vmem:[%s1 + $0x30] sm:$0xff]
        %v543 = vld [vmem:[%s1 + $0x38] sm:$0xff]
        %v544 = vld [vmem:[%s1 + $0x40] sm:$0xff]
        %v545 = vld [vmem:[%s1 + $0x48] sm:$0xff]
        %v546 = vld [vmem:[%s1 + $0x50] sm:$0xff]
        %v547 = vld [vmem:[%s1 + $0x58] sm:$0xff]
        %v548 = vld [vmem:[%s1 + $0x60] sm:$0xff]
        %v549 = vld [vmem:[%s1 + $0x68] sm:$0xff]
        %v550 = vld [vmem:[%s1 + $0x70] sm:$0xff]
        %v551 = vld [vmem:[%s1 + $0x78] sm:$0xff]
        %v552 = vld [vmem:[%s2] sm:$0xff]
        %v553 = vld [vmem:[%s2 + $0x8] sm:$0xff]
        %v554 = vld [vmem:[%s2 + $0x10] sm:$0xff]
        %v555 = vld [vmem:[%s2 + $0x18] sm:$0xff]
        %v556 = vld [vmem:[%s2 + $0x20] sm:$0xff]
        %v557 = vld [vmem:[%s2 + $0x28] sm:$0xff]
        %v558 = vld [vmem:[%s2 + $0x30] sm:$0xff]
        %v559 = vld [vmem:[%s2 + $0x38] sm:$0xff]
        %v560 = vld [vmem:[%s2 + $0x40] sm:$0xff]
        %v561 = vld [vmem:[%s2 + $0x48] sm:$0xff]
        %v562 = vld [vmem:[%s2 + $0x50] sm:$0xff]
        %v563 = vld [vmem:[%s2 + $0x58] sm:$0xff]
        %v564 = vld [vmem:[%s2 + $0x60] sm:$0xff]
        %v565 = vld [vmem:[%s2 + $0x68] sm:$0xff]
        %v566 = vld [vmem:[%s2 + $0x70] sm:$0xff]
        %v567 = vld [vmem:[%s2 + $0x78] sm:$0xff]
        %568 = vmatpush.msra.mxu0 %v567
        %569 = vmatpush.msra.mxu0 %v566
        %570 = vmatpush.msra.mxu0 %v565
        %571 = vmatpush.msra.mxu0 %v564
        %572 = vmatpush.msra.mxu0 %v563
        %573 = vmatpush.msra.mxu0 %v562
        %574 = vmatpush.msra.mxu0 %v561
        %575 = vmatpush.msra.mxu0 %v560
        %576 = vmatpush.msra.mxu0 %v559
        %577 = vmatpush.msra.mxu0 %v558
        %578 = vmatpush.msra.mxu0 %v557
        %579 = vmatpush.msra.mxu0 %v556
        %580 = vmatpush.msra.mxu0 %v555
        %581 = vmatpush.msra.mxu0 %v554
        %582 = vmatpush.msra.mxu0 %v553
        %583 = vmatpush.msra.mxu0 %v552
        %584 = vmatmul.f32.gmra.mxu0 %v520
        %v585 = vpop.f32.mrf.mxu0
        %v586 = vadd.f32 0.0, %v585
        %587 = vmatmul.f32.gmra.mxu0 %v521
        %v588 = vpop.f32.mrf.mxu0
        %v589 = vadd.f32 0.0, %v588
        %590 = vmatmul.f32.gmra.mxu0 %v522
        %v591 = vpop.f32.mrf.mxu0
        %v592 = vadd.f32 0.0, %v591
        %593 = vmatmul.f32.gmra.mxu0 %v523
        %v594 = vpop.f32.mrf.mxu0
        %v595 = vadd.f32 0.0, %v594
        %596 = vmatmul.f32.gmra.mxu0 %v524
        %v597 = vpop.f32.mrf.mxu0
        %v598 = vadd.f32 0.0, %v597
        %599 = vmatmul.f32.gmra.mxu0 %v525
        %v600 = vpop.f32.mrf.mxu0
        %v601 = vadd.f32 0.0, %v600
        %602 = vmatmul.f32.gmra.mxu0 %v526
        %v603 = vpop.f32.mrf.mxu0
        %v604 = vadd.f32 0.0, %v603
        %605 = vmatmul.f32.gmra.mxu0 %v527
        %v606 = vpop.f32.mrf.mxu0
        %v607 = vadd.f32 0.0, %v606
        %608 = vmatmul.f32.gmra.mxu0 %v528
        %v609 = vpop.f32.mrf.mxu0
        %v610 = vadd.f32 0.0, %v609
        %611 = vmatmul.f32.gmra.mxu0 %v529
        %v612 = vpop.f32.mrf.mxu0
        %v613 = vadd.f32 0.0, %v612
        %614 = vmatmul.f32.gmra.mxu0 %v530
        %v615 = vpop.f32.mrf.mxu0
        %v616 = vadd.f32 0.0, %v615
        %617 = vmatmul.f32.gmra.mxu0 %v531
        %v618 = vpop.f32.mrf.mxu0
        %v619 = vadd.f32 0.0, %v618
        %620 = vmatmul.f32.gmra.mxu0 %v532
        %v621 = vpop.f32.mrf.mxu0
        %v622 = vadd.f32 0.0, %v621
        %623 = vmatmul.f32.gmra.mxu0 %v533
        %v624 = vpop.f32.mrf.mxu0
        %v625 = vadd.f32 0.0, %v624
        %626 = vmatmul.f32.gmra.mxu0 %v534
        %v627 = vpop.f32.mrf.mxu0
        %v628 = vadd.f32 0.0, %v627
        %629 = vmatmul.f32.gmra.mxu0 %v535
        %v630 = vpop.f32.mrf.mxu0
        %v631 = vadd.f32 0.0, %v630
        %632 = vdwg.mxu0
        %633 = vmatpush.msra.mxu0 %v551
        %634 = vmatpush.msra.mxu0 %v550
        %635 = vmatpush.msra.mxu0 %v549
        %636 = vmatpush.msra.mxu0 %v548
        %637 = vmatpush.msra.mxu0 %v547
        %638 = vmatpush.msra.mxu0 %v546
        %639 = vmatpush.msra.mxu0 %v545
        %640 = vmatpush.msra.mxu0 %v544
        %641 = vmatpush.msra.mxu0 %v543
        %642 = vmatpush.msra.mxu0 %v542
        %643 = vmatpush.msra.mxu0 %v541
        %644 = vmatpush.msra.mxu0 %v540
        %645 = vmatpush.msra.mxu0 %v539
        %646 = vmatpush.msra.mxu0 %v538
        %647 = vmatpush.msra.mxu0 %v537
        %648 = vmatpush.msra.mxu0 %v536
        %649 = vmatmul.f32.gmra.mxu0 %v424
        %v650 = vpop.f32.mrf.mxu0
        %v651 = vadd.f32 %v586, %v650
        %652 = vmatmul.f32.gmra.mxu0 %v425
        %v653 = vpop.f32.mrf.mxu0
        %v654 = vadd.f32 %v589, %v653
        %655 = vmatmul.f32.gmra.mxu0 %v426
        %v656 = vpop.f32.mrf.mxu0
        %v657 = vadd.f32 %v592, %v656
        %658 = vmatmul.f32.gmra.mxu0 %v427
        %v659 = vpop.f32.mrf.mxu0
        %v660 = vadd.f32 %v595, %v659
        %661 = vmatmul.f32.gmra.mxu0 %v428
        %v662 = vpop.f32.mrf.mxu0
        %v663 = vadd.f32 %v598, %v662
        %664 = vmatmul.f32.gmra.mxu0 %v429
        %v665 = vpop.f32.mrf.mxu0
        %v666 = vadd.f32 %v601, %v665
        %667 = vmatmul.f32.gmra.mxu0 %v430
        %v668 = vpop.f32.mrf.mxu0
        %v669 = vadd.f32 %v604, %v668
        %670 = vmatmul.f32.gmra.mxu0 %v431
        %v671 = vpop.f32.mrf.mxu0
        %v672 = vadd.f32 %v607, %v671
        %673 = vmatmul.f32.gmra.mxu0 %v432
        %v674 = vpop.f32.mrf.mxu0
        %v675 = vadd.f32 %v610, %v674
        %676 = vmatmul.f32.gmra.mxu0 %v433
        %v677 = vpop.f32.mrf.mxu0
        %v678 = vadd.f32 %v613, %v677
        %679 = vmatmul.f32.gmra.mxu0 %v434
        %v680 = vpop.f32.mrf.mxu0
        %v681 = vadd.f32 %v616, %v680
        %682 = vmatmul.f32.gmra.mxu0 %v435
        %v683 = vpop.f32.mrf.mxu0
        %v684 = vadd.f32 %v619, %v683
        %685 = vmatmul.f32.gmra.mxu0 %v436
        %v686 = vpop.f32.mrf.mxu0
        %v687 = vadd.f32 %v622, %v686
        %688 = vmatmul.f32.gmra.mxu0 %v437
        %v689 = vpop.f32.mrf.mxu0
        %v690 = vadd.f32 %v625, %v689
        %691 = vmatmul.f32.gmra.mxu0 %v438
        %v692 = vpop.f32.mrf.mxu0
        %v693 = vadd.f32 %v628, %v692
        %694 = vmatmul.f32.gmra.mxu0 %v439
        %v695 = vpop.f32.mrf.mxu0
        %v696 = vadd.f32 %v631, %v695
        %697 = vdwg.mxu0
        %v698 = vld [vmem:[%s3] sm:$0x1]
        %v700 = vperm.slane %v698, 0
        %v702 = vadd.f32 %v651, %v700
        %v703 = vadd.f32 %v654, %v700
        %v704 = vadd.f32 %v657, %v700
        %v705 = vadd.f32 %v660, %v700
        %v706 = vadd.f32 %v663, %v700
        %v707 = vadd.f32 %v666, %v700
        %v708 = vadd.f32 %v669, %v700
        %v709 = vadd.f32 %v672, %v700
        %v710 = vadd.f32 %v675, %v700
        %v711 = vadd.f32 %v678, %v700
        %v712 = vadd.f32 %v681, %v700
        %v713 = vadd.f32 %v684, %v700
        %v714 = vadd.f32 %v687, %v700
        %v715 = vadd.f32 %v690, %v700
        %v716 = vadd.f32 %v693, %v700
        %v717 = vadd.f32 %v696, %v700
        %vm718 = vcmp.gt.f32.partialorder %v702, 0.0
        %vm719 = vcmp.gt.f32.partialorder %v703, 0.0
        %vm720 = vcmp.gt.f32.partialorder %v704, 0.0
        %vm721 = vcmp.gt.f32.partialorder %v705, 0.0
        %vm722 = vcmp.gt.f32.partialorder %v706, 0.0
        %vm723 = vcmp.gt.f32.partialorder %v707, 0.0
        %vm724 = vcmp.gt.f32.partialorder %v708, 0.0
        %vm725 = vcmp.gt.f32.partialorder %v709, 0.0
        %vm726 = vcmp.gt.f32.partialorder %v710, 0.0
        %vm727 = vcmp.gt.f32.partialorder %v711, 0.0
        %vm728 = vcmp.gt.f32.partialorder %v712, 0.0
        %vm729 = vcmp.gt.f32.partialorder %v713, 0.0
        %vm730 = vcmp.gt.f32.partialorder %v714, 0.0
        %vm731 = vcmp.gt.f32.partialorder %v715, 0.0
        %vm732 = vcmp.gt.f32.partialorder %v716, 0.0
        %vm733 = vcmp.gt.f32.partialorder %v717, 0.0
        %v734 = vmul.f32 %v702, 1.442695
        %v735 = vpow.pop %v734
        %v736 = vmul.f32 %v703, 1.442695
        %v737 = vpow.pop %v736
        %v738 = vmul.f32 %v704, 1.442695
        %v739 = vpow.pop %v738
        %v740 = vmul.f32 %v705, 1.442695
        %v741 = vpow.pop %v740
        %v742 = vmul.f32 %v706, 1.442695
        %v743 = vpow.pop %v742
        %v744 = vmul.f32 %v707, 1.442695
        %v745 = vpow.pop %v744
        %v746 = vmul.f32 %v708, 1.442695
        %v747 = vpow.pop %v746
        %v748 = vmul.f32 %v709, 1.442695
        %v749 = vpow.pop %v748
        %v750 = vmul.f32 %v710, 1.442695
        %v751 = vpow.pop %v750
        %v752 = vmul.f32 %v711, 1.442695
        %v753 = vpow.pop %v752
        %v754 = vmul.f32 %v712, 1.442695
        %v755 = vpow.pop %v754
        %v756 = vmul.f32 %v713, 1.442695
        %v757 = vpow.pop %v756
        %v758 = vmul.f32 %v714, 1.442695
        %v759 = vpow.pop %v758
        %v760 = vmul.f32 %v715, 1.442695
        %v761 = vpow.pop %v760
        %v762 = vmul.f32 %v716, 1.442695
        %v763 = vpow.pop %v762
        %v764 = vmul.f32 %v717, 1.442695
        %v765 = vpow.pop %v764
        %v766 = vsub.f32 %v735, 1.0
        %v767 = vsub.f32 %v737, 1.0
        %v768 = vsub.f32 %v739, 1.0
        %v769 = vsub.f32 %v741, 1.0
        %v770 = vsub.f32 %v743, 1.0
        %v771 = vsub.f32 %v745, 1.0
        %v772 = vsub.f32 %v747, 1.0
        %v773 = vsub.f32 %v749, 1.0
        %v774 = vsub.f32 %v751, 1.0
        %v775 = vsub.f32 %v753, 1.0
        %v776 = vsub.f32 %v755, 1.0
        %v777 = vsub.f32 %v757, 1.0
        %v778 = vsub.f32 %v759, 1.0
        %v779 = vsub.f32 %v761, 1.0
        %v780 = vsub.f32 %v763, 1.0
        %v781 = vsub.f32 %v765, 1.0
        %v782 = vmul.f32 %v766, 1.6732632
        %v783 = vmul.f32 %v767, 1.6732632
        %v784 = vmul.f32 %v768, 1.6732632
        %v785 = vmul.f32 %v769, 1.6732632
        %v786 = vmul.f32 %v770, 1.6732632
        %v787 = vmul.f32 %v771, 1.6732632
        %v788 = vmul.f32 %v772, 1.6732632
        %v789 = vmul.f32 %v773, 1.6732632
        %v790 = vmul.f32 %v774, 1.6732632
        %v791 = vmul.f32 %v775, 1.6732632
        %v792 = vmul.f32 %v776, 1.6732632
        %v793 = vmul.f32 %v777, 1.6732632
        %v794 = vmul.f32 %v778, 1.6732632
        %v795 = vmul.f32 %v779, 1.6732632
        %v796 = vmul.f32 %v780, 1.6732632
        %v797 = vmul.f32 %v781, 1.6732632
        %v798 = vsel %vm718, %v702, %v782
        %v799 = vsel %vm719, %v703, %v783
        %v800 = vsel %vm720, %v704, %v784
        %v801 = vsel %vm721, %v705, %v785
        %v802 = vsel %vm722, %v706, %v786
        %v803 = vsel %vm723, %v707, %v787
        %v804 = vsel %vm724, %v708, %v788
        %v805 = vsel %vm725, %v709, %v789
        %v806 = vsel %vm726, %v710, %v790
        %v807 = vsel %vm727, %v711, %v791
        %v808 = vsel %vm728, %v712, %v792
        %v809 = vsel %vm729, %v713, %v793
        %v810 = vsel %vm730, %v714, %v794
        %v811 = vsel %vm731, %v715, %v795
        %v812 = vsel %vm732, %v716, %v796
        %v813 = vsel %vm733, %v717, %v797
        %v814 = vmul.f32 %v798, 1.050701
        %v815 = vmul.f32 %v799, 1.050701
        %v816 = vmul.f32 %v800, 1.050701
        %v817 = vmul.f32 %v801, 1.050701
        %v818 = vmul.f32 %v802, 1.050701
        %v819 = vmul.f32 %v803, 1.050701
        %v820 = vmul.f32 %v804, 1.050701
        %v821 = vmul.f32 %v805, 1.050701
        %v822 = vmul.f32 %v806, 1.050701
        %v823 = vmul.f32 %v807, 1.050701
        %v824 = vmul.f32 %v808, 1.050701
        %v825 = vmul.f32 %v809, 1.050701
        %v826 = vmul.f32 %v810, 1.050701
        %v827 = vmul.f32 %v811, 1.050701
        %v828 = vmul.f32 %v812, 1.050701
        %v829 = vmul.f32 %v813, 1.050701
        %v830 = vld [vmem:[%s4] sm:$0xff]
        %v831 = vld [vmem:[%s4 + $0x8] sm:$0xff]
        %v832 = vld [vmem:[%s4 + $0x10] sm:$0xff]
        %v833 = vld [vmem:[%s4 + $0x18] sm:$0xff]
        %v834 = vld [vmem:[%s4 + $0x20] sm:$0xff]
        %v835 = vld [vmem:[%s4 + $0x28] sm:$0xff]
        %v836 = vld [vmem:[%s4 + $0x30] sm:$0xff]
        %v837 = vld [vmem:[%s4 + $0x38] sm:$0xff]
        %v838 = vld [vmem:[%s4 + $0x40] sm:$0xff]
        %v839 = vld [vmem:[%s4 + $0x48] sm:$0xff]
        %v840 = vld [vmem:[%s4 + $0x50] sm:$0xff]
        %v841 = vld [vmem:[%s4 + $0x58] sm:$0xff]
        %v842 = vld [vmem:[%s4 + $0x60] sm:$0xff]
        %v843 = vld [vmem:[%s4 + $0x68] sm:$0xff]
        %v844 = vld [vmem:[%s4 + $0x70] sm:$0xff]
        %v845 = vld [vmem:[%s4 + $0x78] sm:$0xff]
        %v846 = vld [vmem:[%s5] sm:$0x1]
        %v848 = vperm.slane %v846, 0
        %850 = vmatpush.msra.mxu0 %v845
        %851 = vmatpush.msra.mxu0 %v844
        %852 = vmatpush.msra.mxu0 %v843
        %853 = vmatpush.msra.mxu0 %v842
        %854 = vmatpush.msra.mxu0 %v841
        %855 = vmatpush.msra.mxu0 %v840
        %856 = vmatpush.msra.mxu0 %v839
        %857 = vmatpush.msra.mxu0 %v838
        %858 = vmatpush.msra.mxu0 %v837
        %859 = vmatpush.msra.mxu0 %v836
        %860 = vmatpush.msra.mxu0 %v835
        %861 = vmatpush.msra.mxu0 %v834
        %862 = vmatpush.msra.mxu0 %v833
        %863 = vmatpush.msra.mxu0 %v832
        %864 = vmatpush.msra.mxu0 %v831
        %865 = vmatpush.msra.mxu0 %v830
        %866 = vmatmul.f32.gmra.mxu0 %v814
        %v867 = vpop.f32.mrf.mxu0
        %v868 = vadd.f32 %v848, %v867
        %869 = vmatmul.f32.gmra.mxu0 %v815
        %v870 = vpop.f32.mrf.mxu0
        %v871 = vadd.f32 %v848, %v870
        %872 = vmatmul.f32.gmra.mxu0 %v816
        %v873 = vpop.f32.mrf.mxu0
        %v874 = vadd.f32 %v848, %v873
        %875 = vmatmul.f32.gmra.mxu0 %v817
        %v876 = vpop.f32.mrf.mxu0
        %v877 = vadd.f32 %v848, %v876
        %878 = vmatmul.f32.gmra.mxu0 %v818
        %v879 = vpop.f32.mrf.mxu0
        %v880 = vadd.f32 %v848, %v879
        %881 = vmatmul.f32.gmra.mxu0 %v819
        %v882 = vpop.f32.mrf.mxu0
        %v883 = vadd.f32 %v848, %v882
        %884 = vmatmul.f32.gmra.mxu0 %v820
        %v885 = vpop.f32.mrf.mxu0
        %v886 = vadd.f32 %v848, %v885
        %887 = vmatmul.f32.gmra.mxu0 %v821
        %v888 = vpop.f32.mrf.mxu0
        %v889 = vadd.f32 %v848, %v888
        %890 = vmatmul.f32.gmra.mxu0 %v822
        %v891 = vpop.f32.mrf.mxu0
        %v892 = vadd.f32 %v848, %v891
        %893 = vmatmul.f32.gmra.mxu0 %v823
        %v894 = vpop.f32.mrf.mxu0
        %v895 = vadd.f32 %v848, %v894
        %896 = vmatmul.f32.gmra.mxu0 %v824
        %v897 = vpop.f32.mrf.mxu0
        %v898 = vadd.f32 %v848, %v897
        %899 = vmatmul.f32.gmra.mxu0 %v825
        %v900 = vpop.f32.mrf.mxu0
        %v901 = vadd.f32 %v848, %v900
        %902 = vmatmul.f32.gmra.mxu0 %v826
        %v903 = vpop.f32.mrf.mxu0
        %v904 = vadd.f32 %v848, %v903
        %905 = vmatmul.f32.gmra.mxu0 %v827
        %v906 = vpop.f32.mrf.mxu0
        %v907 = vadd.f32 %v848, %v906
        %908 = vmatmul.f32.gmra.mxu0 %v828
        %v909 = vpop.f32.mrf.mxu0
        %v910 = vadd.f32 %v848, %v909
        %911 = vmatmul.f32.gmra.mxu0 %v829
        %v912 = vpop.f32.mrf.mxu0
        %v913 = vadd.f32 %v848, %v912
        %914 = vdwg.mxu0
        %vm915 = vcmp.gt.f32.partialorder %v868, 0.0
        %vm916 = vcmp.gt.f32.partialorder %v871, 0.0
        %vm917 = vcmp.gt.f32.partialorder %v874, 0.0
        %vm918 = vcmp.gt.f32.partialorder %v877, 0.0
        %vm919 = vcmp.gt.f32.partialorder %v880, 0.0
        %vm920 = vcmp.gt.f32.partialorder %v883, 0.0
        %vm921 = vcmp.gt.f32.partialorder %v886, 0.0
        %vm922 = vcmp.gt.f32.partialorder %v889, 0.0
        %vm923 = vcmp.gt.f32.partialorder %v892, 0.0
        %vm924 = vcmp.gt.f32.partialorder %v895, 0.0
        %vm925 = vcmp.gt.f32.partialorder %v898, 0.0
        %vm926 = vcmp.gt.f32.partialorder %v901, 0.0
        %vm927 = vcmp.gt.f32.partialorder %v904, 0.0
        %vm928 = vcmp.gt.f32.partialorder %v907, 0.0
        %vm929 = vcmp.gt.f32.partialorder %v910, 0.0
        %vm930 = vcmp.gt.f32.partialorder %v913, 0.0
        %v931 = vmul.f32 %v868, 1.442695
        %v932 = vpow.pop %v931
        %v933 = vmul.f32 %v871, 1.442695
        %v934 = vpow.pop %v933
        %v935 = vmul.f32 %v874, 1.442695
        %v936 = vpow.pop %v935
        %v937 = vmul.f32 %v877, 1.442695
        %v938 = vpow.pop %v937
        %v939 = vmul.f32 %v880, 1.442695
        %v940 = vpow.pop %v939
        %v941 = vmul.f32 %v883, 1.442695
        %v942 = vpow.pop %v941
        %v943 = vmul.f32 %v886, 1.442695
        %v944 = vpow.pop %v943
        %v945 = vmul.f32 %v889, 1.442695
        %v946 = vpow.pop %v945
        %v947 = vmul.f32 %v892, 1.442695
        %v948 = vpow.pop %v947
        %v949 = vmul.f32 %v895, 1.442695
        %v950 = vpow.pop %v949
        %v951 = vmul.f32 %v898, 1.442695
        %v952 = vpow.pop %v951
        %v953 = vmul.f32 %v901, 1.442695
        %v954 = vpow.pop %v953
        %v955 = vmul.f32 %v904, 1.442695
        %v956 = vpow.pop %v955
        %v957 = vmul.f32 %v907, 1.442695
        %v958 = vpow.pop %v957
        %v959 = vmul.f32 %v910, 1.442695
        %v960 = vpow.pop %v959
        %v961 = vmul.f32 %v913, 1.442695
        %v962 = vpow.pop %v961
        %v963 = vsub.f32 %v932, 1.0
        %v964 = vsub.f32 %v934, 1.0
        %v965 = vsub.f32 %v936, 1.0
        %v966 = vsub.f32 %v938, 1.0
        %v967 = vsub.f32 %v940, 1.0
        %v968 = vsub.f32 %v942, 1.0
        %v969 = vsub.f32 %v944, 1.0
        %v970 = vsub.f32 %v946, 1.0
        %v971 = vsub.f32 %v948, 1.0
        %v972 = vsub.f32 %v950, 1.0
        %v973 = vsub.f32 %v952, 1.0
        %v974 = vsub.f32 %v954, 1.0
        %v975 = vsub.f32 %v956, 1.0
        %v976 = vsub.f32 %v958, 1.0
        %v977 = vsub.f32 %v960, 1.0
        %v978 = vsub.f32 %v962, 1.0
        %v979 = vmul.f32 %v963, 1.6732632
        %v980 = vmul.f32 %v964, 1.6732632
        %v981 = vmul.f32 %v965, 1.6732632
        %v982 = vmul.f32 %v966, 1.6732632
        %v983 = vmul.f32 %v967, 1.6732632
        %v984 = vmul.f32 %v968, 1.6732632
        %v985 = vmul.f32 %v969, 1.6732632
        %v986 = vmul.f32 %v970, 1.6732632
        %v987 = vmul.f32 %v971, 1.6732632
        %v988 = vmul.f32 %v972, 1.6732632
        %v989 = vmul.f32 %v973, 1.6732632
        %v990 = vmul.f32 %v974, 1.6732632
        %v991 = vmul.f32 %v975, 1.6732632
        %v992 = vmul.f32 %v976, 1.6732632
        %v993 = vmul.f32 %v977, 1.6732632
        %v994 = vmul.f32 %v978, 1.6732632
        %v995 = vsel %vm915, %v868, %v979
        %v996 = vsel %vm916, %v871, %v980
        %v997 = vsel %vm917, %v874, %v981
        %v998 = vsel %vm918, %v877, %v982
        %v999 = vsel %vm919, %v880, %v983
        %v1000 = vsel %vm920, %v883, %v984
        %v1001 = vsel %vm921, %v886, %v985
        %v1002 = vsel %vm922, %v889, %v986
        %v1003 = vsel %vm923, %v892, %v987
        %v1004 = vsel %vm924, %v895, %v988
        %v1005 = vsel %vm925, %v898, %v989
        %v1006 = vsel %vm926, %v901, %v990
        %v1007 = vsel %vm927, %v904, %v991
        %v1008 = vsel %vm928, %v907, %v992
        %v1009 = vsel %vm929, %v910, %v993
        %v1010 = vsel %vm930, %v913, %v994
        %v1011 = vmul.f32 %v995, 1.050701
        %v1012 = vmul.f32 %v996, 1.050701
        %v1013 = vmul.f32 %v997, 1.050701
        %v1014 = vmul.f32 %v998, 1.050701
        %v1015 = vmul.f32 %v999, 1.050701
        %v1016 = vmul.f32 %v1000, 1.050701
        %v1017 = vmul.f32 %v1001, 1.050701
        %v1018 = vmul.f32 %v1002, 1.050701
        %v1019 = vmul.f32 %v1003, 1.050701
        %v1020 = vmul.f32 %v1004, 1.050701
        %v1021 = vmul.f32 %v1005, 1.050701
        %v1022 = vmul.f32 %v1006, 1.050701
        %v1023 = vmul.f32 %v1007, 1.050701
        %v1024 = vmul.f32 %v1008, 1.050701
        %v1025 = vmul.f32 %v1009, 1.050701
        %v1026 = vmul.f32 %v1010, 1.050701
        %1027 = vst [vmem:[%s298] sm:$0xff] %v1011
        %1028 = vst [vmem:[%s298 + $0x8] sm:$0xff] %v1012
        %1029 = vst [vmem:[%s298 + $0x10] sm:$0xff] %v1013
        %1030 = vst [vmem:[%s298 + $0x18] sm:$0xff] %v1014
        %1031 = vst [vmem:[%s298 + $0x20] sm:$0xff] %v1015
        %1032 = vst [vmem:[%s298 + $0x28] sm:$0xff] %v1016
        %1033 = vst [vmem:[%s298 + $0x30] sm:$0xff] %v1017
        %1034 = vst [vmem:[%s298 + $0x38] sm:$0xff] %v1018
        %1035 = vst [vmem:[%s298 + $0x40] sm:$0xff] %v1019
        %1036 = vst [vmem:[%s298 + $0x48] sm:$0xff] %v1020
        %1037 = vst [vmem:[%s298 + $0x50] sm:$0xff] %v1021
        %1038 = vst [vmem:[%s298 + $0x58] sm:$0xff] %v1022
        %1039 = vst [vmem:[%s298 + $0x60] sm:$0xff] %v1023
        %1040 = vst [vmem:[%s298 + $0x68] sm:$0xff] %v1024
        %1041 = vst [vmem:[%s298 + $0x70] sm:$0xff] %v1025
        %1042 = vst [vmem:[%s298 + $0x78] sm:$0xff] %v1026
        %v1043 = vld [vmem:[#allocation2] sm:$0xff]
        %v1044 = vld [vmem:[#allocation2 + $0x8] sm:$0xff]
        %v1045 = vld [vmem:[#allocation2 + $0x10] sm:$0xff]
        %v1046 = vld [vmem:[#allocation2 + $0x18] sm:$0xff]
        %v1047 = vld [vmem:[#allocation2 + $0x20] sm:$0xff]
        %v1048 = vld [vmem:[#allocation2 + $0x28] sm:$0xff]
        %v1049 = vld [vmem:[#allocation2 + $0x30] sm:$0xff]
        %v1050 = vld [vmem:[#allocation2 + $0x38] sm:$0xff]
        %v1051 = vld [vmem:[#allocation2 + $0x40] sm:$0xff]
        %v1052 = vld [vmem:[#allocation2 + $0x48] sm:$0xff]
        %v1053 = vld [vmem:[#allocation2 + $0x50] sm:$0xff]
        %v1054 = vld [vmem:[#allocation2 + $0x58] sm:$0xff]
        %v1055 = vld [vmem:[#allocation2 + $0x60] sm:$0xff]
        %v1056 = vld [vmem:[#allocation2 + $0x68] sm:$0xff]
        %v1057 = vld [vmem:[#allocation2 + $0x70] sm:$0xff]
        %v1058 = vld [vmem:[#allocation2 + $0x78] sm:$0xff]
        %1059 = vxpose.xlu0.b32.start [1/16] %v424, 128
        %1060 = vxpose.xlu0.b32.cont [2/16] %v425, 128
        %1061 = vxpose.xlu0.b32.cont [3/16] %v426, 128
        %1062 = vxpose.xlu0.b32.cont [4/16] %v427, 128
        %1063 = vxpose.xlu0.b32.cont [5/16] %v428, 128
        %1064 = vxpose.xlu0.b32.cont [6/16] %v429, 128
        %1065 = vxpose.xlu0.b32.cont [7/16] %v430, 128
        %1066 = vxpose.xlu0.b32.cont [8/16] %v431, 128
        %1067 = vxpose.xlu0.b32.cont [9/16] %v432, 128
        %1068 = vxpose.xlu0.b32.cont [10/16] %v433, 128
        %1069 = vxpose.xlu0.b32.cont [11/16] %v434, 128
        %1070 = vxpose.xlu0.b32.cont [12/16] %v435, 128
        %1071 = vxpose.xlu0.b32.cont [13/16] %v436, 128
        %1072 = vxpose.xlu0.b32.cont [14/16] %v437, 128
        %1073 = vxpose.xlu0.b32.cont [15/16] %v438, 128
        %1074 = vxpose.xlu0.b32.end [16/16] %v439, 128
        %v1075 = vpop.trf.xlu0
        %v1076 = vpop.trf.xlu0
        %v1077 = vpop.trf.xlu0
        %v1078 = vpop.trf.xlu0
        %v1079 = vpop.trf.xlu0
        %v1080 = vpop.trf.xlu0
        %v1081 = vpop.trf.xlu0
        %v1082 = vpop.trf.xlu0
        %v1083 = vpop.trf.xlu0
        %v1084 = vpop.trf.xlu0
        %v1085 = vpop.trf.xlu0
        %v1086 = vpop.trf.xlu0
        %v1087 = vpop.trf.xlu0
        %v1088 = vpop.trf.xlu0
        %v1089 = vpop.trf.xlu0
        %v1090 = vpop.trf.xlu0
        %1091 = vmatpush.msra.mxu0 %v1026
        %1092 = vmatpush.msra.mxu0 %v1025
        %1093 = vmatpush.msra.mxu0 %v1024
        %1094 = vmatpush.msra.mxu0 %v1023
        %1095 = vmatpush.msra.mxu0 %v1022
        %1096 = vmatpush.msra.mxu0 %v1021
        %1097 = vmatpush.msra.mxu0 %v1020
        %1098 = vmatpush.msra.mxu0 %v1019
        %1099 = vmatpush.msra.mxu0 %v1018
        %1100 = vmatpush.msra.mxu0 %v1017
        %1101 = vmatpush.msra.mxu0 %v1016
        %1102 = vmatpush.msra.mxu0 %v1015
        %1103 = vmatpush.msra.mxu0 %v1014
        %1104 = vmatpush.msra.mxu0 %v1013
        %1105 = vmatpush.msra.mxu0 %v1012
        %1106 = vmatpush.msra.mxu0 %v1011
        %1107 = vmatmul.f32.gmra.mxu0 %v1075
        %v1108 = vpop.f32.mrf.mxu0
        %v1109 = vadd.f32 0.0, %v1108
        %1110 = vmatmul.f32.gmra.mxu0 %v1076
        %v1111 = vpop.f32.mrf.mxu0
        %v1112 = vadd.f32 0.0, %v1111
        %1113 = vmatmul.f32.gmra.mxu0 %v1077
        %v1114 = vpop.f32.mrf.mxu0
        %v1115 = vadd.f32 0.0, %v1114
        %1116 = vmatmul.f32.gmra.mxu0 %v1078
        %v1117 = vpop.f32.mrf.mxu0
        %v1118 = vadd.f32 0.0, %v1117
        %1119 = vmatmul.f32.gmra.mxu0 %v1079
        %v1120 = vpop.f32.mrf.mxu0
        %v1121 = vadd.f32 0.0, %v1120
        %1122 = vmatmul.f32.gmra.mxu0 %v1080
        %v1123 = vpop.f32.mrf.mxu0
        %v1124 = vadd.f32 0.0, %v1123
        %1125 = vmatmul.f32.gmra.mxu0 %v1081
        %v1126 = vpop.f32.mrf.mxu0
        %v1127 = vadd.f32 0.0, %v1126
        %1128 = vmatmul.f32.gmra.mxu0 %v1082
        %v1129 = vpop.f32.mrf.mxu0
        %v1130 = vadd.f32 0.0, %v1129
        %1131 = vmatmul.f32.gmra.mxu0 %v1083
        %v1132 = vpop.f32.mrf.mxu0
        %v1133 = vadd.f32 0.0, %v1132
        %1134 = vmatmul.f32.gmra.mxu0 %v1084
        %v1135 = vpop.f32.mrf.mxu0
        %v1136 = vadd.f32 0.0, %v1135
        %1137 = vmatmul.f32.gmra.mxu0 %v1085
        %v1138 = vpop.f32.mrf.mxu0
        %v1139 = vadd.f32 0.0, %v1138
        %1140 = vmatmul.f32.gmra.mxu0 %v1086
        %v1141 = vpop.f32.mrf.mxu0
        %v1142 = vadd.f32 0.0, %v1141
        %1143 = vmatmul.f32.gmra.mxu0 %v1087
        %v1144 = vpop.f32.mrf.mxu0
        %v1145 = vadd.f32 0.0, %v1144
        %1146 = vmatmul.f32.gmra.mxu0 %v1088
        %v1147 = vpop.f32.mrf.mxu0
        %v1148 = vadd.f32 0.0, %v1147
        %1149 = vmatmul.f32.gmra.mxu0 %v1089
        %v1150 = vpop.f32.mrf.mxu0
        %v1151 = vadd.f32 0.0, %v1150
        %1152 = vmatmul.f32.gmra.mxu0 %v1090
        %v1153 = vpop.f32.mrf.mxu0
        %v1154 = vadd.f32 0.0, %v1153
        %1155 = vdwg.mxu0
        %v1156 = vadd.f32 %v1043, %v1109
        %v1157 = vadd.f32 %v1044, %v1112
        %v1158 = vadd.f32 %v1045, %v1115
        %v1159 = vadd.f32 %v1046, %v1118
        %v1160 = vadd.f32 %v1047, %v1121
        %v1161 = vadd.f32 %v1048, %v1124
        %v1162 = vadd.f32 %v1049, %v1127
        %v1163 = vadd.f32 %v1050, %v1130
        %v1164 = vadd.f32 %v1051, %v1133
        %v1165 = vadd.f32 %v1052, %v1136
        %v1166 = vadd.f32 %v1053, %v1139
        %v1167 = vadd.f32 %v1054, %v1142
        %v1168 = vadd.f32 %v1055, %v1145
        %v1169 = vadd.f32 %v1056, %v1148
        %v1170 = vadd.f32 %v1057, %v1151
        %v1171 = vadd.f32 %v1058, %v1154
        %1172 = vst [vmem:[#allocation2] sm:$0xff] %v1156
        %1173 = vst [vmem:[#allocation2 + $0x8] sm:$0xff] %v1157
        %1174 = vst [vmem:[#allocation2 + $0x10] sm:$0xff] %v1158
        %1175 = vst [vmem:[#allocation2 + $0x18] sm:$0xff] %v1159
        %1176 = vst [vmem:[#allocation2 + $0x20] sm:$0xff] %v1160
        %1177 = vst [vmem:[#allocation2 + $0x28] sm:$0xff] %v1161
        %1178 = vst [vmem:[#allocation2 + $0x30] sm:$0xff] %v1162
        %1179 = vst [vmem:[#allocation2 + $0x38] sm:$0xff] %v1163
        %1180 = vst [vmem:[#allocation2 + $0x40] sm:$0xff] %v1164
        %1181 = vst [vmem:[#allocation2 + $0x48] sm:$0xff] %v1165
        %1182 = vst [vmem:[#allocation2 + $0x50] sm:$0xff] %v1166
        %1183 = vst [vmem:[#allocation2 + $0x58] sm:$0xff] %v1167
        %1184 = vst [vmem:[#allocation2 + $0x60] sm:$0xff] %v1168
        %1185 = vst [vmem:[#allocation2 + $0x68] sm:$0xff] %v1169
        %1186 = vst [vmem:[#allocation2 + $0x70] sm:$0xff] %v1170
        %1187 = vst [vmem:[#allocation2 + $0x78] sm:$0xff] %v1171
        %p1188 = scmp.eq.s32.totalorder %s24, 2
        // Predicated region
        $region53: #{tpu_custom_call.1} parent=47 // pred_check
          %p1189 = pneg %p1188
        $region54: #{tpu_custom_call.1} parent=47 // pred_check_branch
          %1191 = sbr.rel (%p1189) target = $region56
        $region55: #{tpu_custom_call.1} parent=47 // pred_region
          %v1192 = vld [vmem:[#allocation2] sm:$0xff]
          %v1193 = vld [vmem:[#allocation2 + $0x8] sm:$0xff]
          %v1194 = vld [vmem:[#allocation2 + $0x10] sm:$0xff]
          %v1195 = vld [vmem:[#allocation2 + $0x18] sm:$0xff]
          %v1196 = vld [vmem:[#allocation2 + $0x20] sm:$0xff]
          %v1197 = vld [vmem:[#allocation2 + $0x28] sm:$0xff]
          %v1198 = vld [vmem:[#allocation2 + $0x30] sm:$0xff]
          %v1199 = vld [vmem:[#allocation2 + $0x38] sm:$0xff]
          %v1200 = vld [vmem:[#allocation2 + $0x40] sm:$0xff]
          %v1201 = vld [vmem:[#allocation2 + $0x48] sm:$0xff]
          %v1202 = vld [vmem:[#allocation2 + $0x50] sm:$0xff]
          %v1203 = vld [vmem:[#allocation2 + $0x58] sm:$0xff]
          %v1204 = vld [vmem:[#allocation2 + $0x60] sm:$0xff]
          %v1205 = vld [vmem:[#allocation2 + $0x68] sm:$0xff]
          %v1206 = vld [vmem:[#allocation2 + $0x70] sm:$0xff]
          %v1207 = vld [vmem:[#allocation2 + $0x78] sm:$0xff]
          %v1208 = vld [vmem:[%s6] sm:$0xff]
          %v1209 = vld [vmem:[%s6 + $0x8] sm:$0xff]
          %v1210 = vld [vmem:[%s6 + $0x10] sm:$0xff]
          %v1211 = vld [vmem:[%s6 + $0x18] sm:$0xff]
          %v1212 = vld [vmem:[%s6 + $0x20] sm:$0xff]
          %v1213 = vld [vmem:[%s6 + $0x28] sm:$0xff]
          %v1214 = vld [vmem:[%s6 + $0x30] sm:$0xff]
          %v1215 = vld [vmem:[%s6 + $0x38] sm:$0xff]
          %v1216 = vld [vmem:[%s6 + $0x40] sm:$0xff]
          %v1217 = vld [vmem:[%s6 + $0x48] sm:$0xff]
          %v1218 = vld [vmem:[%s6 + $0x50] sm:$0xff]
          %v1219 = vld [vmem:[%s6 + $0x58] sm:$0xff]
          %v1220 = vld [vmem:[%s6 + $0x60] sm:$0xff]
          %v1221 = vld [vmem:[%s6 + $0x68] sm:$0xff]
          %v1222 = vld [vmem:[%s6 + $0x70] sm:$0xff]
          %v1223 = vld [vmem:[%s6 + $0x78] sm:$0xff]
          %1225 = vset.pattern.permute.xlu0 0
          %1226 = vperm.xlu0 %1225, %v1208
          %v1227 = vpop.permute.xlu0 %1226
          %1230 = vset.pattern.permute.xlu0 0
          %1231 = vperm.xlu0 %1230, %v1209
          %v1232 = vpop.permute.xlu0 %1231
          %1235 = vset.pattern.permute.xlu0 0
          %1236 = vperm.xlu0 %1235, %v1210
          %v1237 = vpop.permute.xlu0 %1236
          %1240 = vset.pattern.permute.xlu0 0
          %1241 = vperm.xlu0 %1240, %v1211
          %v1242 = vpop.permute.xlu0 %1241
          %1245 = vset.pattern.permute.xlu0 0
          %1246 = vperm.xlu0 %1245, %v1212
          %v1247 = vpop.permute.xlu0 %1246
          %1250 = vset.pattern.permute.xlu0 0
          %1251 = vperm.xlu0 %1250, %v1213
          %v1252 = vpop.permute.xlu0 %1251
          %1255 = vset.pattern.permute.xlu0 0
          %1256 = vperm.xlu0 %1255, %v1214
          %v1257 = vpop.permute.xlu0 %1256
          %1260 = vset.pattern.permute.xlu0 0
          %1261 = vperm.xlu0 %1260, %v1215
          %v1262 = vpop.permute.xlu0 %1261
          %1265 = vset.pattern.permute.xlu0 0
          %1266 = vperm.xlu0 %1265, %v1216
          %v1267 = vpop.permute.xlu0 %1266
          %1270 = vset.pattern.permute.xlu0 0
          %1271 = vperm.xlu0 %1270, %v1217
          %v1272 = vpop.permute.xlu0 %1271
          %1275 = vset.pattern.permute.xlu0 0
          %1276 = vperm.xlu0 %1275, %v1218
          %v1277 = vpop.permute.xlu0 %1276
          %1280 = vset.pattern.permute.xlu0 0
          %1281 = vperm.xlu0 %1280, %v1219
          %v1282 = vpop.permute.xlu0 %1281
          %1285 = vset.pattern.permute.xlu0 0
          %1286 = vperm.xlu0 %1285, %v1220
          %v1287 = vpop.permute.xlu0 %1286
          %1290 = vset.pattern.permute.xlu0 0
          %1291 = vperm.xlu0 %1290, %v1221
          %v1292 = vpop.permute.xlu0 %1291
          %1295 = vset.pattern.permute.xlu0 0
          %1296 = vperm.xlu0 %1295, %v1222
          %v1297 = vpop.permute.xlu0 %1296
          %1300 = vset.pattern.permute.xlu0 0
          %1301 = vperm.xlu0 %1300, %v1223
          %v1302 = vpop.permute.xlu0 %1301
          %v1304 = vmul.f32 %v1192, %v1227
          %v1305 = vmul.f32 %v1193, %v1232
          %v1306 = vmul.f32 %v1194, %v1237
          %v1307 = vmul.f32 %v1195, %v1242
          %v1308 = vmul.f32 %v1196, %v1247
          %v1309 = vmul.f32 %v1197, %v1252
          %v1310 = vmul.f32 %v1198, %v1257
          %v1311 = vmul.f32 %v1199, %v1262
          %v1312 = vmul.f32 %v1200, %v1267
          %v1313 = vmul.f32 %v1201, %v1272
          %v1314 = vmul.f32 %v1202, %v1277
          %v1315 = vmul.f32 %v1203, %v1282
          %v1316 = vmul.f32 %v1204, %v1287
          %v1317 = vmul.f32 %v1205, %v1292
          %v1318 = vmul.f32 %v1206, %v1297
          %v1319 = vmul.f32 %v1207, %v1302
          %1320 = vst [vmem:[#allocation2] sm:$0xff] %v1304
          %1321 = vst [vmem:[#allocation2 + $0x8] sm:$0xff] %v1305
          %1322 = vst [vmem:[#allocation2 + $0x10] sm:$0xff] %v1306
          %1323 = vst [vmem:[#allocation2 + $0x18] sm:$0xff] %v1307
          %1324 = vst [vmem:[#allocation2 + $0x20] sm:$0xff] %v1308
          %1325 = vst [vmem:[#allocation2 + $0x28] sm:$0xff] %v1309
          %1326 = vst [vmem:[#allocation2 + $0x30] sm:$0xff] %v1310
          %1327 = vst [vmem:[#allocation2 + $0x38] sm:$0xff] %v1311
          %1328 = vst [vmem:[#allocation2 + $0x40] sm:$0xff] %v1312
          %1329 = vst [vmem:[#allocation2 + $0x48] sm:$0xff] %v1313
          %1330 = vst [vmem:[#allocation2 + $0x50] sm:$0xff] %v1314
          %1331 = vst [vmem:[#allocation2 + $0x58] sm:$0xff] %v1315
          %1332 = vst [vmem:[#allocation2 + $0x60] sm:$0xff] %v1316
          %1333 = vst [vmem:[#allocation2 + $0x68] sm:$0xff] %v1317
          %1334 = vst [vmem:[#allocation2 + $0x70] sm:$0xff] %v1318
          %1335 = vst [vmem:[#allocation2 + $0x78] sm:$0xff] %v1319
        $region56: #{tpu_custom_call.1} parent=47 // pred_fallthru
          _
        %s1336 = sand.u32 %s205, 1
        %s1337 = scalar_lea.sflag [#allocation5], %s1336
        %s1338 = sand.u32 %s205, 1
        %s1339 = smul.addr %s1338, 128
        %s1340 = scalar_lea.vmem [#allocation4], %s1339
        // Predicated region
        $region57: #{tpu_custom_call.1} parent=47 // pred_check
          %p1341 = pneg %p189
        $region58: #{tpu_custom_call.1} parent=47 // pred_check_branch
          %1343 = sbr.rel (%p1341) target = $region60
        $region59: #{tpu_custom_call.1} parent=47 // pred_region
          %1345 = vsyncadd [#allocation3], 0
          %s1346 = sshll.u32 [#allocation2], 4
          %s1347 = int_to_ptr.vmem [resolvable:$true] %s1346
          %s1348 = sshll.u32 %s7, 4
          %s1349 = int_to_ptr.hbm [resolvable:$true] %s1348
          %1354 = dma.vmem_to_hbm [thread:$0]  %s1347, 2048, %s1349, [#allocation3], 128, 128, 8
        $region60: #{tpu_custom_call.1} parent=47 // pred_fallthru
          _
        // Predicated region
        $region61: #{tpu_custom_call.1} parent=47 // pred_check
          %p1355 = pneg %p215
        $region62: #{tpu_custom_call.1} parent=47 // pred_check_branch
          %1357 = sbr.rel (%p1355) target = $region64
        $region63: #{tpu_custom_call.1} parent=47 // pred_region
          %s1358 = smul.u32 16, %s24
          %1360 = vsyncadd %s1337, 0
          %s1361 = smul.addr %s1358, 8
          %s1362 = scalar_lea.hbm %s8, %s1361
          %s1363 = sshll.u32 %s1340, 4
          %s1364 = int_to_ptr.vmem [resolvable:$true] %s1363
          %s1365 = sshll.u32 %s1362, 4
          %s1366 = int_to_ptr.hbm [resolvable:$true] %s1365
          %1371 = dma.vmem_to_hbm [thread:$0]  %s1364, 2048, %s1366, %s1337, 128, 128, 8
        $region64: #{tpu_custom_call.1} parent=47 // pred_fallthru
          _
        // Predicated region
        $region65: #{tpu_custom_call.1} parent=47 // pred_check
          %p1372 = pneg %p189
        $region66: #{tpu_custom_call.1} parent=47 // pred_check_branch
          %1374 = sbr.rel (%p1372) target = $region68
        $region67: #{tpu_custom_call.1} parent=47 // pred_region
          %1376 = dma.done [#allocation3], 2048
        $region68: #{tpu_custom_call.1} parent=47 // pred_fallthru
          _
      $region48: #{tpu_custom_call.1} parent=5 // pred_fallthru
        _
      %p1377 = scmp.le.s32.totalorder 2, %s19
      // Predicated region
      $region69: #{tpu_custom_call.1} parent=5 // pred_check
        %p1378 = pneg %p1377
      $region70: #{tpu_custom_call.1} parent=5 // pred_check_branch
        %1380 = sbr.rel (%p1378) target = $region72
      $region71: #{tpu_custom_call.1} parent=5 // pred_region
        %s1381 = ssub.s32 %s19, 2
        // Predicated region
        $region73: #{tpu_custom_call.1} parent=71 // pred_check
          %p1382 = pneg %p221
        $region74: #{tpu_custom_call.1} parent=71 // pred_check_branch
          %1384 = sbr.rel (%p1382) target = $region76
        $region75: #{tpu_custom_call.1} parent=71 // pred_region
          %s1385 = sand.u32 %s206, 1
          %s1386 = scalar_lea.sflag [#allocation5], %s1385
          %s1387 = sand.u32 %s206, 1
          %s1388 = smul.addr %s1387, 128
          %s1389 = scalar_lea.vmem [#allocation4], %s1388
          %1391 = dma.done %s1386, 2048
        $region76: #{tpu_custom_call.1} parent=71 // pred_fallthru
          _
      $region72: #{tpu_custom_call.1} parent=5 // pred_fallthru
        _
    $region6: #{tpu_custom_call.1} parent=1 // loop_footer
      %s23 = sadd.s32 1, %s19
    $region7: #{tpu_custom_call.1} parent=1 // loop_footer_branch
      %18 = sbr.rel target = $region3
    $region8: #{tpu_custom_call.1} parent=1 // loop_exit
      _
    %1392 = vsyncpa [#allocation3], 1
    %s1393 = scalar_lea.sflag [#allocation3], 1
    %1394 = vsyncpa %s1393, 1
    %1395 = vsyncpa [#allocation5], 1
    %s1396 = scalar_lea.sflag [#allocation5], 1
    %1397 = vsyncpa %s1396, 1

</llo_original>
